<compile_context>
chip_gen: v7x
topology: tpu7x:2x2x1
jax: 0.10.0
libtpu: 0.0.40
codegen_flags: <defaults>
</compile_context>

<pallas_src>
import functools
import math

import jax
import jax.numpy as jnp
from jax.experimental import pallas as pl
from jax.experimental.pallas import tpu as pltpu

BN_EPS = 1e-5            # nn.BatchNorm2d default
LEAKY_SLOPE = 0.2        # nn.LeakyReLU(negative_slope=0.2)


# --------------------------------------------------------------------------
# Kernel
# --------------------------------------------------------------------------
def res_dwconv2_block_kernel(
    x_ref,                                   # (1, Cin, S)   S = H*W, f32
    mask_l_ref, mask_r_ref,                  # (1, S) each: 0/1 column-boundary masks
    dw1_ref,                                 # (Cin, 9)     depthwise 3x3 taps
    pw1_w_ref, pw1_b_ref,                    # (Cout, Cin), (Cout, 1)  [BN1 + dw1 bias folded]
    dw2_ref,                                 # (Cout, 9)
    pw2_w_ref, pw2_b_ref,                    # (Cout, Cout), (Cout, 1) [BN2 + dw2 bias folded]
    skip_w_ref, skip_b_ref,                  # (Cout, Cin), (Cout, 1)  [dw1x1+pw1x1+BNs folded]
    o_ref,                                   # (1, Cout, S)
    *, W: int,
):
    x = x_ref[0]                             # (Cin, S): channels on sublanes, pixels on lanes
    S = x.shape[1]
    mask_l = mask_l_ref[...]                 # 0 where w == 0      (left neighbour invalid)
    mask_r = mask_r_ref[...]                 # 0 where w == W - 1  (right neighbour invalid)

    # Flat zero pad covering the +-(W+1) tap offsets, rounded up to a multiple
    # of 128 lanes so the concatenation below is tile-aligned.
    P = ((W + 1 + 127) // 128) * 128

    def dwconv3x3(a, dw_ref):
        """Per-channel 3x3 conv, stride 1, zero padding 1, on the flat (C, S) layout."""
        C = a.shape[0]
        taps = dw_ref[...]                                           # (C, 9)
        zp = jnp.zeros((C, P), jnp.float32)
        ap = jnp.concatenate([zp, a, zp], axis=1)                    # (C, S + 2P), aligned
        acc = jnp.zeros((C, S), jnp.float32)
        for dh in (-1, 0, 1):
            for dw in (-1, 0, 1):
                off = dh * W + dw
                # sh[:, s] = a[:, s + off] with out-of-image rows reading the zero pad
                sh = a if off == 0 else ap[:, P + off:P + off + S]
                if dw == -1:
                    sh = sh * mask_l                                 # kill row wrap at w == 0
                elif dw == 1:
                    sh = sh * mask_r                                 # kill row wrap at w == W-1
                k = (dh + 1) * 3 + (dw + 1)
                acc = acc + sh * taps[:, k:k + 1]                    # per-channel tap
        return acc

    def lrelu(v):                            # negative_slope = 0.2 < 1
        return jnp.maximum(v, LEAKY_SLOPE * v)

    # ---- conv_block: DSConv(3x3) -> BN1(folded) -> LReLU -> DSConv(3x3) -> BN2(folded) -> LReLU
    d1 = dwconv3x3(x, dw1_ref)                                        # (Cin, S)
    a1 = lrelu(jnp.dot(pw1_w_ref[...], d1,
                       preferred_element_type=jnp.float32) + pw1_b_ref[...])   # (Cout, S)
    d2 = dwconv3x3(a1, dw2_ref)                                       # (Cout, S)
    a2 = lrelu(jnp.dot(pw2_w_ref[...], d2,
                       preferred_element_type=jnp.float32) + pw2_b_ref[...])   # (Cout, S)

    # ---- conv_skip: DSConv(1x1) -> BNs, entirely folded into one matmul + bias
    sk = jnp.dot(skip_w_ref[...], x,
                 preferred_element_type=jnp.float32) + skip_b_ref[...]         # (Cout, S)

    o_ref[0] = (a2 + sk).astype(o_ref.dtype)


# --------------------------------------------------------------------------
# Host wrapper: eval-BN / bias folding + pallas_call (no layout transposes)
# --------------------------------------------------------------------------
@jax.jit
def res_dwconv2_block(x_nchw, params):
    """Forward pass of ResDepWiseConv2Block (eval mode). x_nchw: (B, Cin, H, W)."""
    B, Cin, H, W = x_nchw.shape
    Cout = params["pw1_w"].shape[0]
    S = H * W

    def bn_fold(g, b, m, v):
        s = g / jnp.sqrt(v + BN_EPS)
        return s, b - m * s

    # depthwise 3x3 taps: (C, 1, 3, 3) -> (C, 9); their biases fold into pointwise biases.
    dw1_w = params["dw1_w"].reshape(Cin, 9)
    dw2_w = params["dw2_w"].reshape(Cout, 9)

    # pointwise 1x1 weights (Cout, Cin, 1, 1) -> (Cout, Cin); fold eval BN (row scale)
    # and the preceding depthwise bias (column-sum into the bias).
    s1, t1 = bn_fold(params["bn1_g"], params["bn1_b"], params["bn1_m"], params["bn1_v"])
    pw1_w = params["pw1_w"][:, :, 0, 0] * s1[:, None]
    pw1_b = (pw1_w @ params["dw1_b"] + params["pw1_b"] * s1 + t1).reshape(Cout, 1)

    s2, t2 = bn_fold(params["bn2_g"], params["bn2_b"], params["bn2_m"], params["bn2_v"])
    pw2_w = params["pw2_w"][:, :, 0, 0] * s2[:, None]
    pw2_b = (pw2_w @ params["dw2_b"] + params["pw2_b"] * s2 + t2).reshape(Cout, 1)

    # skip: depthwise 1x1 (per-channel scale a, shift d) + pointwise 1x1 + BNs -> one affine
    a = params["dws_w"].reshape(Cin)
    d = params["dws_b"].reshape(Cin)
    wp = params["pws_w"][:, :, 0, 0]                                   # (Cout, Cin)
    ss, ts = bn_fold(params["bns_g"], params["bns_b"], params["bns_m"], params["bns_v"])
    skip_w = (wp * a[None, :]) * ss[:, None]
    skip_b = ((wp @ d + params["pws_b"]) * ss + ts).reshape(Cout, 1)

    # column-boundary masks (row-wrap suppression for the +-1 column taps)
    w_idx = jnp.arange(S, dtype=jnp.int32) % W
    mask_l = (w_idx != 0).astype(jnp.float32).reshape(1, S)
    mask_r = (w_idx != W - 1).astype(jnp.float32).reshape(1, S)

    x_flat = x_nchw.reshape(B, Cin, S)       # free reshape, stays NCHW-contiguous

    w2 = lambda shape: pl.BlockSpec(shape, lambda b: (0, 0))

    out_flat = pl.pallas_call(
        functools.partial(res_dwconv2_block_kernel, W=W),
        out_shape=jax.ShapeDtypeStruct((B, Cout, S), x_nchw.dtype),
        grid=(B,),
        in_specs=[
            pl.BlockSpec((1, Cin, S), lambda b: (b, 0, 0)),            # x
            w2((1, S)), w2((1, S)),                                    # column masks
            w2((Cin, 9)),                                              # dw1 taps
            w2((Cout, Cin)), w2((Cout, 1)),                            # pw1 (+BN1, +dw1 bias)
            w2((Cout, 9)),                                             # dw2 taps
            w2((Cout, Cout)), w2((Cout, 1)),                           # pw2 (+BN2, +dw2 bias)
            w2((Cout, Cin)), w2((Cout, 1)),                            # skip (dw+pw+BNs)
        ],
        out_specs=pl.BlockSpec((1, Cout, S), lambda b: (b, 0, 0)),
        compiler_params=pltpu.CompilerParams(dimension_semantics=("parallel",)),
    )(
        x_flat, mask_l, mask_r,
        dw1_w, pw1_w, pw1_b,
        dw2_w, pw2_w, pw2_b,
        skip_w, skip_b,
    )
    return out_flat.reshape(B, Cout, H, W)


# --------------------------------------------------------------------------
# Parameter init (mirrors the PyTorch module: xavier conv weights, zero biases,
# BatchNorm running stats — randomized here so the BN fold is exercised).
# --------------------------------------------------------------------------
def init_params(key, cin, cout):
    ks = jax.random.split(key, 16)

    def xavier(k, shape):  # Conv2d weight (out, in/groups, kh, kw)
        fan_in = shape[1] * shape[2] * shape[3]
        fan_out = shape[0] * shape[2] * shape[3]
        bound = math.sqrt(6.0 / (fan_in + fan_out))
        return jax.random.uniform(k, shape, jnp.float32, -bound, bound)

    def bn(k, c):
        k1, k2, k3, k4 = jax.random.split(k, 4)
        return (jax.random.uniform(k1, (c,), jnp.float32, 0.5, 1.5),    # gamma
                0.1 * jax.random.normal(k2, (c,), jnp.float32),         # beta
                0.1 * jax.random.normal(k3, (c,), jnp.float32),         # running_mean
                jax.random.uniform(k4, (c,), jnp.float32, 0.5, 1.5))    # running_var

    bn1 = bn(ks[10], cout)
    bn2 = bn(ks[11], cout)
    bns = bn(ks[12], cout)
    return {
        "dw1_w": xavier(ks[0], (cin, 1, 3, 3)),    "dw1_b": jnp.zeros((cin,), jnp.float32),
        "pw1_w": xavier(ks[1], (cout, cin, 1, 1)), "pw1_b": jnp.zeros((cout,), jnp.float32),
        "dw2_w": xavier(ks[2], (cout, 1, 3, 3)),   "dw2_b": jnp.zeros((cout,), jnp.float32),
        "pw2_w": xavier(ks[3], (cout, cout, 1, 1)), "pw2_b": jnp.zeros((cout,), jnp.float32),
        "dws_w": xavier(ks[4], (cin, 1, 1, 1)),    "dws_b": jnp.zeros((cin,), jnp.float32),
        "pws_w": xavier(ks[5], (cout, cin, 1, 1)), "pws_b": jnp.zeros((cout,), jnp.float32),
        "bn1_g": bn1[0], "bn1_b": bn1[1], "bn1_m": bn1[2], "bn1_v": bn1[3],
        "bn2_g": bn2[0], "bn2_b": bn2[1], "bn2_m": bn2[2], "bn2_v": bn2[3],
        "bns_g": bns[0], "bns_b": bns[1], "bns_m": bns[2], "bns_v": bns[3],
    }


# --------------------------------------------------------------------------
# Pure-JAX reference (independent: lax.conv_general_dilated, unfolded BN)
# --------------------------------------------------------------------------
def _conv2d_ref(x, w, b, stride=1, padding=0, groups=1):
    dn = jax.lax.conv_dimension_numbers(x.shape, w.shape, ("NCHW", "OIHW", "NCHW"))
    y = jax.lax.conv_general_dilated(
        x, w, window_strides=(stride, stride),
        padding=[(padding, padding), (padding, padding)],
        dimension_numbers=dn, feature_group_count=groups,
        precision=jax.lax.Precision.HIGHEST)
    return y + b.reshape(1, -1, 1, 1)


def _bn_ref(x, g, b, m, v):
    s = (g / jnp.sqrt(v + BN_EPS)).reshape(1, -1, 1, 1)
    return (x - m.reshape(1, -1, 1, 1)) * s + b.reshape(1, -1, 1, 1)


def _lrelu_ref(x):
    return jnp.where(x >= 0, x, LEAKY_SLOPE * x)


def reference_forward(x, p):
    cin = x.shape[1]
    cout = p["pw1_w"].shape[0]
    y = _conv2d_ref(x, p["dw1_w"], p["dw1_b"], padding=1, groups=cin)
    y = _conv2d_ref(y, p["pw1_w"], p["pw1_b"])
    y = _lrelu_ref(_bn_ref(y, p["bn1_g"], p["bn1_b"], p["bn1_m"], p["bn1_v"]))
    y = _conv2d_ref(y, p["dw2_w"], p["dw2_b"], padding=1, groups=cout)
    y = _conv2d_ref(y, p["pw2_w"], p["pw2_b"])
    y = _lrelu_ref(_bn_ref(y, p["bn2_g"], p["bn2_b"], p["bn2_m"], p["bn2_v"]))
    s = _conv2d_ref(x, p["dws_w"], p["dws_b"], padding=0, groups=cin)
    s = _conv2d_ref(s, p["pws_w"], p["pws_b"])
    s = _bn_ref(s, p["bns_g"], p["bns_b"], p["bns_m"], p["bns_v"])
    return y + s


# --------------------------------------------------------------------------
if __name__ == "__main__":
    # small shapes consistent with the module defaults (input/output channels 32)
    B, Cin, Cout, H, W = 2, 32, 32, 16, 16

    root = jax.random.PRNGKey(0)
    kx, kp = jax.random.split(root)
    x = jax.random.normal(kx, (B, Cin, H, W), dtype=jnp.float32)
    params = init_params(kp, Cin, Cout)

    out = res_dwconv2_block(x, params)
    out = jax.block_until_ready(out)
    assert out.shape == (B, Cout, H, W)

    ref = jax.block_until_ready(reference_forward(x, params))
    max_err = float(jnp.max(jnp.abs(out - ref)))
    assert max_err < 2e-2, f"kernel mismatch vs reference: max abs err = {max_err}"

    print("KERNEL_OK")
</pallas_src>

<mosaic_0001>
module attributes {stable_mosaic.version = 11 : i64} {
  func.func @res_dwconv2_block_kernel(%arg0: i32, %arg1: memref<1x32x256xf32, #tpu.memory_space<vmem>>, %arg2: memref<1x256xf32, #tpu.memory_space<vmem>>, %arg3: memref<1x256xf32, #tpu.memory_space<vmem>>, %arg4: memref<32x9xf32, #tpu.memory_space<vmem>>, %arg5: memref<32x32xf32, #tpu.memory_space<vmem>>, %arg6: memref<32x1xf32, #tpu.memory_space<vmem>>, %arg7: memref<32x9xf32, #tpu.memory_space<vmem>>, %arg8: memref<32x32xf32, #tpu.memory_space<vmem>>, %arg9: memref<32x1xf32, #tpu.memory_space<vmem>>, %arg10: memref<32x32xf32, #tpu.memory_space<vmem>>, %arg11: memref<32x1xf32, #tpu.memory_space<vmem>>, %arg12: memref<1x32x256xf32, #tpu.memory_space<vmem>>) attributes {dimension_semantics = [#tpu.dimension_semantics<parallel>], iteration_bounds = array<i64: 2>, scalar_prefetch = 0 : i64, scratch_operands = 0 : i64, tpu.core_type = #tpu.core_type<tc>, window_params = [{transform_indices = @transform_0, window_bounds = array<i64: 1, 32, 256>}, {pipeline_mode = #tpu.pipeline_mode<synchronous>, transform_indices = @transform_1, window_bounds = array<i64: 1, 256>}, {pipeline_mode = #tpu.pipeline_mode<synchronous>, transform_indices = @transform_2, window_bounds = array<i64: 1, 256>}, {pipeline_mode = #tpu.pipeline_mode<synchronous>, transform_indices = @transform_3, window_bounds = array<i64: 32, 9>}, {pipeline_mode = #tpu.pipeline_mode<synchronous>, transform_indices = @transform_4, window_bounds = array<i64: 32, 32>}, {pipeline_mode = #tpu.pipeline_mode<synchronous>, transform_indices = @transform_5, window_bounds = array<i64: 32, 1>}, {pipeline_mode = #tpu.pipeline_mode<synchronous>, transform_indices = @transform_6, window_bounds = array<i64: 32, 9>}, {pipeline_mode = #tpu.pipeline_mode<synchronous>, transform_indices = @transform_7, window_bounds = array<i64: 32, 32>}, {pipeline_mode = #tpu.pipeline_mode<synchronous>, transform_indices = @transform_8, window_bounds = array<i64: 32, 1>}, {pipeline_mode = #tpu.pipeline_mode<synchronous>, transform_indices = @transform_9, window_bounds = array<i64: 32, 32>}, {pipeline_mode = #tpu.pipeline_mode<synchronous>, transform_indices = @transform_10, window_bounds = array<i64: 32, 1>}, {transform_indices = @transform_11, window_bounds = array<i64: 1, 32, 256>}]} {
    %c0 = arith.constant 0 : index
    %c0_0 = arith.constant 0 : index
    %c0_1 = arith.constant 0 : index
    %0 = vector.load %arg1[%c0, %c0_0, %c0_1] : memref<1x32x256xf32, #tpu.memory_space<vmem>>, vector<1x32x256xf32>
    %1 = vector.shape_cast %0 : vector<1x32x256xf32> to vector<32x256xf32>
    %c0_2 = arith.constant 0 : index
    %c0_3 = arith.constant 0 : index
    %2 = vector.load %arg2[%c0_2, %c0_3] : memref<1x256xf32, #tpu.memory_space<vmem>>, vector<1x256xf32>
    %c0_4 = arith.constant 0 : index
    %c0_5 = arith.constant 0 : index
    %3 = vector.load %arg3[%c0_4, %c0_5] : memref<1x256xf32, #tpu.memory_space<vmem>>, vector<1x256xf32>
    %c0_6 = arith.constant 0 : index
    %c0_7 = arith.constant 0 : index
    %4 = vector.load %arg4[%c0_6, %c0_7] : memref<32x9xf32, #tpu.memory_space<vmem>>, vector<32x9xf32>
    %cst = arith.constant 0.000000e+00 : f32
    %5 = vector.broadcast %cst : f32 to vector<32x128xf32>
    %6 = tpu.concatenate %5, %1, %5 in 1 : vector<32x128xf32>, vector<32x256xf32>, vector<32x128xf32> -> vector<32x512xf32>
    %cst_8 = arith.constant 0.000000e+00 : f32
    %7 = vector.broadcast %cst_8 : f32 to vector<32x256xf32>
    %8 = vector.extract_strided_slice %6 {offsets = [0, 111], sizes = [32, 256], strides = [1, 1]} : vector<32x512xf32> to vector<32x256xf32>
    %9 = vector.broadcast %2 : vector<1x256xf32> to vector<32x256xf32>
    %10 = arith.mulf %8, %9 : vector<32x256xf32>
    %11 = vector.extract_strided_slice %4 {offsets = [0, 0], sizes = [32, 1], strides = [1, 1]} : vector<32x9xf32> to vector<32x1xf32>
    %12 = vector.broadcast %11 : vector<32x1xf32> to vector<32x256xf32>
    %13 = arith.mulf %10, %12 : vector<32x256xf32>
    %14 = arith.addf %7, %13 : vector<32x256xf32>
    %15 = vector.extract_strided_slice %6 {offsets = [0, 112], sizes = [32, 256], strides = [1, 1]} : vector<32x512xf32> to vector<32x256xf32>
    %16 = vector.extract_strided_slice %4 {offsets = [0, 1], sizes = [32, 1], strides = [1, 1]} : vector<32x9xf32> to vector<32x1xf32>
    %17 = vector.broadcast %16 : vector<32x1xf32> to vector<32x256xf32>
    %18 = arith.mulf %15, %17 : vector<32x256xf32>
    %19 = arith.addf %14, %18 : vector<32x256xf32>
    %20 = vector.extract_strided_slice %6 {offsets = [0, 113], sizes = [32, 256], strides = [1, 1]} : vector<32x512xf32> to vector<32x256xf32>
    %21 = vector.broadcast %3 : vector<1x256xf32> to vector<32x256xf32>
    %22 = arith.mulf %20, %21 : vector<32x256xf32>
    %23 = vector.extract_strided_slice %4 {offsets = [0, 2], sizes = [32, 1], strides = [1, 1]} : vector<32x9xf32> to vector<32x1xf32>
    %24 = vector.broadcast %23 : vector<32x1xf32> to vector<32x256xf32>
    %25 = arith.mulf %22, %24 : vector<32x256xf32>
    %26 = arith.addf %19, %25 : vector<32x256xf32>
    %27 = vector.extract_strided_slice %6 {offsets = [0, 127], sizes = [32, 256], strides = [1, 1]} : vector<32x512xf32> to vector<32x256xf32>
    %28 = vector.broadcast %2 : vector<1x256xf32> to vector<32x256xf32>
    %29 = arith.mulf %27, %28 : vector<32x256xf32>
    %30 = vector.extract_strided_slice %4 {offsets = [0, 3], sizes = [32, 1], strides = [1, 1]} : vector<32x9xf32> to vector<32x1xf32>
    %31 = vector.broadcast %30 : vector<32x1xf32> to vector<32x256xf32>
    %32 = arith.mulf %29, %31 : vector<32x256xf32>
    %33 = arith.addf %26, %32 : vector<32x256xf32>
    %34 = vector.extract_strided_slice %4 {offsets = [0, 4], sizes = [32, 1], strides = [1, 1]} : vector<32x9xf32> to vector<32x1xf32>
    %35 = vector.broadcast %34 : vector<32x1xf32> to vector<32x256xf32>
    %36 = arith.mulf %1, %35 : vector<32x256xf32>
    %37 = arith.addf %33, %36 : vector<32x256xf32>
    %38 = vector.extract_strided_slice %6 {offsets = [0, 129], sizes = [32, 256], strides = [1, 1]} : vector<32x512xf32> to vector<32x256xf32>
    %39 = vector.broadcast %3 : vector<1x256xf32> to vector<32x256xf32>
    %40 = arith.mulf %38, %39 : vector<32x256xf32>
    %41 = vector.extract_strided_slice %4 {offsets = [0, 5], sizes = [32, 1], strides = [1, 1]} : vector<32x9xf32> to vector<32x1xf32>
    %42 = vector.broadcast %41 : vector<32x1xf32> to vector<32x256xf32>
    %43 = arith.mulf %40, %42 : vector<32x256xf32>
    %44 = arith.addf %37, %43 : vector<32x256xf32>
    %45 = vector.extract_strided_slice %6 {offsets = [0, 143], sizes = [32, 256], strides = [1, 1]} : vector<32x512xf32> to vector<32x256xf32>
    %46 = vector.broadcast %2 : vector<1x256xf32> to vector<32x256xf32>
    %47 = arith.mulf %45, %46 : vector<32x256xf32>
    %48 = vector.extract_strided_slice %4 {offsets = [0, 6], sizes = [32, 1], strides = [1, 1]} : vector<32x9xf32> to vector<32x1xf32>
    %49 = vector.broadcast %48 : vector<32x1xf32> to vector<32x256xf32>
    %50 = arith.mulf %47, %49 : vector<32x256xf32>
    %51 = arith.addf %44, %50 : vector<32x256xf32>
    %52 = vector.extract_strided_slice %6 {offsets = [0, 144], sizes = [32, 256], strides = [1, 1]} : vector<32x512xf32> to vector<32x256xf32>
    %53 = vector.extract_strided_slice %4 {offsets = [0, 7], sizes = [32, 1], strides = [1, 1]} : vector<32x9xf32> to vector<32x1xf32>
    %54 = vector.broadcast %53 : vector<32x1xf32> to vector<32x256xf32>
    %55 = arith.mulf %52, %54 : vector<32x256xf32>
    %56 = arith.addf %51, %55 : vector<32x256xf32>
    %57 = vector.extract_strided_slice %6 {offsets = [0, 145], sizes = [32, 256], strides = [1, 1]} : vector<32x512xf32> to vector<32x256xf32>
    %58 = vector.broadcast %3 : vector<1x256xf32> to vector<32x256xf32>
    %59 = arith.mulf %57, %58 : vector<32x256xf32>
    %60 = vector.extract_strided_slice %4 {offsets = [0, 8], sizes = [32, 1], strides = [1, 1]} : vector<32x9xf32> to vector<32x1xf32>
    %61 = vector.broadcast %60 : vector<32x1xf32> to vector<32x256xf32>
    %62 = arith.mulf %59, %61 : vector<32x256xf32>
    %63 = arith.addf %56, %62 : vector<32x256xf32>
    %c0_9 = arith.constant 0 : index
    %c0_10 = arith.constant 0 : index
    %64 = vector.load %arg5[%c0_9, %c0_10] : memref<32x32xf32, #tpu.memory_space<vmem>>, vector<32x32xf32>
    %cst_11 = arith.constant dense<0.000000e+00> : vector<32x256xf32>
    %65 = tpu.matmul %64, %63, %cst_11 {dimension_numbers = #tpu.dot_dimension_numbers<[1], [0], [0], [1], [0, 0, 1, 1], [], []>} : vector<32x32xf32>, vector<32x256xf32>, vector<32x256xf32> -> vector<32x256xf32>
    %c0_12 = arith.constant 0 : index
    %c0_13 = arith.constant 0 : index
    %66 = vector.load %arg6[%c0_12, %c0_13] : memref<32x1xf32, #tpu.memory_space<vmem>>, vector<32x1xf32>
    %67 = vector.broadcast %66 : vector<32x1xf32> to vector<32x256xf32>
    %68 = arith.addf %65, %67 : vector<32x256xf32>
    %cst_14 = arith.constant 2.000000e-01 : f32
    %69 = vector.broadcast %cst_14 : f32 to vector<32x256xf32>
    %70 = arith.mulf %69, %68 : vector<32x256xf32>
    %71 = arith.maximumf %68, %70 : vector<32x256xf32>
    %c0_15 = arith.constant 0 : index
    %c0_16 = arith.constant 0 : index
    %72 = vector.load %arg7[%c0_15, %c0_16] : memref<32x9xf32, #tpu.memory_space<vmem>>, vector<32x9xf32>
    %cst_17 = arith.constant 0.000000e+00 : f32
    %73 = vector.broadcast %cst_17 : f32 to vector<32x128xf32>
    %74 = tpu.concatenate %73, %71, %73 in 1 : vector<32x128xf32>, vector<32x256xf32>, vector<32x128xf32> -> vector<32x512xf32>
    %cst_18 = arith.constant 0.000000e+00 : f32
    %75 = vector.broadcast %cst_18 : f32 to vector<32x256xf32>
    %76 = vector.extract_strided_slice %74 {offsets = [0, 111], sizes = [32, 256], strides = [1, 1]} : vector<32x512xf32> to vector<32x256xf32>
    %77 = vector.broadcast %2 : vector<1x256xf32> to vector<32x256xf32>
    %78 = arith.mulf %76, %77 : vector<32x256xf32>
    %79 = vector.extract_strided_slice %72 {offsets = [0, 0], sizes = [32, 1], strides = [1, 1]} : vector<32x9xf32> to vector<32x1xf32>
    %80 = vector.broadcast %79 : vector<32x1xf32> to vector<32x256xf32>
    %81 = arith.mulf %78, %80 : vector<32x256xf32>
    %82 = arith.addf %75, %81 : vector<32x256xf32>
    %83 = vector.extract_strided_slice %74 {offsets = [0, 112], sizes = [32, 256], strides = [1, 1]} : vector<32x512xf32> to vector<32x256xf32>
    %84 = vector.extract_strided_slice %72 {offsets = [0, 1], sizes = [32, 1], strides = [1, 1]} : vector<32x9xf32> to vector<32x1xf32>
    %85 = vector.broadcast %84 : vector<32x1xf32> to vector<32x256xf32>
    %86 = arith.mulf %83, %85 : vector<32x256xf32>
    %87 = arith.addf %82, %86 : vector<32x256xf32>
    %88 = vector.extract_strided_slice %74 {offsets = [0, 113], sizes = [32, 256], strides = [1, 1]} : vector<32x512xf32> to vector<32x256xf32>
    %89 = vector.broadcast %3 : vector<1x256xf32> to vector<32x256xf32>
    %90 = arith.mulf %88, %89 : vector<32x256xf32>
    %91 = vector.extract_strided_slice %72 {offsets = [0, 2], sizes = [32, 1], strides = [1, 1]} : vector<32x9xf32> to vector<32x1xf32>
    %92 = vector.broadcast %91 : vector<32x1xf32> to vector<32x256xf32>
    %93 = arith.mulf %90, %92 : vector<32x256xf32>
    %94 = arith.addf %87, %93 : vector<32x256xf32>
    %95 = vector.extract_strided_slice %74 {offsets = [0, 127], sizes = [32, 256], strides = [1, 1]} : vector<32x512xf32> to vector<32x256xf32>
    %96 = vector.broadcast %2 : vector<1x256xf32> to vector<32x256xf32>
    %97 = arith.mulf %95, %96 : vector<32x256xf32>
    %98 = vector.extract_strided_slice %72 {offsets = [0, 3], sizes = [32, 1], strides = [1, 1]} : vector<32x9xf32> to vector<32x1xf32>
    %99 = vector.broadcast %98 : vector<32x1xf32> to vector<32x256xf32>
    %100 = arith.mulf %97, %99 : vector<32x256xf32>
    %101 = arith.addf %94, %100 : vector<32x256xf32>
    %102 = vector.extract_strided_slice %72 {offsets = [0, 4], sizes = [32, 1], strides = [1, 1]} : vector<32x9xf32> to vector<32x1xf32>
    %103 = vector.broadcast %102 : vector<32x1xf32> to vector<32x256xf32>
    %104 = arith.mulf %71, %103 : vector<32x256xf32>
    %105 = arith.addf %101, %104 : vector<32x256xf32>
    %106 = vector.extract_strided_slice %74 {offsets = [0, 129], sizes = [32, 256], strides = [1, 1]} : vector<32x512xf32> to vector<32x256xf32>
    %107 = vector.broadcast %3 : vector<1x256xf32> to vector<32x256xf32>
    %108 = arith.mulf %106, %107 : vector<32x256xf32>
    %109 = vector.extract_strided_slice %72 {offsets = [0, 5], sizes = [32, 1], strides = [1, 1]} : vector<32x9xf32> to vector<32x1xf32>
    %110 = vector.broadcast %109 : vector<32x1xf32> to vector<32x256xf32>
    %111 = arith.mulf %108, %110 : vector<32x256xf32>
    %112 = arith.addf %105, %111 : vector<32x256xf32>
    %113 = vector.extract_strided_slice %74 {offsets = [0, 143], sizes = [32, 256], strides = [1, 1]} : vector<32x512xf32> to vector<32x256xf32>
    %114 = vector.broadcast %2 : vector<1x256xf32> to vector<32x256xf32>
    %115 = arith.mulf %113, %114 : vector<32x256xf32>
    %116 = vector.extract_strided_slice %72 {offsets = [0, 6], sizes = [32, 1], strides = [1, 1]} : vector<32x9xf32> to vector<32x1xf32>
    %117 = vector.broadcast %116 : vector<32x1xf32> to vector<32x256xf32>
    %118 = arith.mulf %115, %117 : vector<32x256xf32>
    %119 = arith.addf %112, %118 : vector<32x256xf32>
    %120 = vector.extract_strided_slice %74 {offsets = [0, 144], sizes = [32, 256], strides = [1, 1]} : vector<32x512xf32> to vector<32x256xf32>
    %121 = vector.extract_strided_slice %72 {offsets = [0, 7], sizes = [32, 1], strides = [1, 1]} : vector<32x9xf32> to vector<32x1xf32>
    %122 = vector.broadcast %121 : vector<32x1xf32> to vector<32x256xf32>
    %123 = arith.mulf %120, %122 : vector<32x256xf32>
    %124 = arith.addf %119, %123 : vector<32x256xf32>
    %125 = vector.extract_strided_slice %74 {offsets = [0, 145], sizes = [32, 256], strides = [1, 1]} : vector<32x512xf32> to vector<32x256xf32>
    %126 = vector.broadcast %3 : vector<1x256xf32> to vector<32x256xf32>
    %127 = arith.mulf %125, %126 : vector<32x256xf32>
    %128 = vector.extract_strided_slice %72 {offsets = [0, 8], sizes = [32, 1], strides = [1, 1]} : vector<32x9xf32> to vector<32x1xf32>
    %129 = vector.broadcast %128 : vector<32x1xf32> to vector<32x256xf32>
    %130 = arith.mulf %127, %129 : vector<32x256xf32>
    %131 = arith.addf %124, %130 : vector<32x256xf32>
    %c0_19 = arith.constant 0 : index
    %c0_20 = arith.constant 0 : index
    %132 = vector.load %arg8[%c0_19, %c0_20] : memref<32x32xf32, #tpu.memory_space<vmem>>, vector<32x32xf32>
    %cst_21 = arith.constant dense<0.000000e+00> : vector<32x256xf32>
    %133 = tpu.matmul %132, %131, %cst_21 {dimension_numbers = #tpu.dot_dimension_numbers<[1], [0], [0], [1], [0, 0, 1, 1], [], []>} : vector<32x32xf32>, vector<32x256xf32>, vector<32x256xf32> -> vector<32x256xf32>
    %c0_22 = arith.constant 0 : index
    %c0_23 = arith.constant 0 : index
    %134 = vector.load %arg9[%c0_22, %c0_23] : memref<32x1xf32, #tpu.memory_space<vmem>>, vector<32x1xf32>
    %135 = vector.broadcast %134 : vector<32x1xf32> to vector<32x256xf32>
    %136 = arith.addf %133, %135 : vector<32x256xf32>
    %cst_24 = arith.constant 2.000000e-01 : f32
    %137 = vector.broadcast %cst_24 : f32 to vector<32x256xf32>
    %138 = arith.mulf %137, %136 : vector<32x256xf32>
    %139 = arith.maximumf %136, %138 : vector<32x256xf32>
    %c0_25 = arith.constant 0 : index
    %c0_26 = arith.constant 0 : index
    %140 = vector.load %arg10[%c0_25, %c0_26] : memref<32x32xf32, #tpu.memory_space<vmem>>, vector<32x32xf32>
    %cst_27 = arith.constant dense<0.000000e+00> : vector<32x256xf32>
    %141 = tpu.matmul %140, %1, %cst_27 {dimension_numbers = #tpu.dot_dimension_numbers<[1], [0], [0], [1], [0, 0, 1, 1], [], []>} : vector<32x32xf32>, vector<32x256xf32>, vector<32x256xf32> -> vector<32x256xf32>
    %c0_28 = arith.constant 0 : index
    %c0_29 = arith.constant 0 : index
    %142 = vector.load %arg11[%c0_28, %c0_29] : memref<32x1xf32, #tpu.memory_space<vmem>>, vector<32x1xf32>
    %143 = vector.broadcast %142 : vector<32x1xf32> to vector<32x256xf32>
    %144 = arith.addf %141, %143 : vector<32x256xf32>
    %145 = arith.addf %139, %144 : vector<32x256xf32>
    %c0_30 = arith.constant 0 : index
    %c0_31 = arith.constant 0 : index
    %c0_32 = arith.constant 0 : index
    %146 = vector.load %arg12[%c0_30, %c0_31, %c0_32] : memref<1x32x256xf32, #tpu.memory_space<vmem>>, vector<1x32x256xf32>
    %147 = vector.shape_cast %146 : vector<1x32x256xf32> to vector<32x256xf32>
    %148 = vector.shape_cast %145 : vector<32x256xf32> to vector<1x32x256xf32>
    tpu.vector_store %arg12[%c0_30, %c0_31, %c0_32], %148 {strides = array<i32>} : memref<1x32x256xf32, #tpu.memory_space<vmem>>, vector<1x32x256xf32>,
    return
  }
  func.func @transform_0(%arg0: i32) -> (i32, i32, i32) {
    %c0_i32 = arith.constant 0 : i32
    %c0_i32_0 = arith.constant 0 : i32
    %c0_i32_1 = arith.constant 0 : i32
    return %arg0, %c0_i32, %c0_i32_0 : i32, i32, i32
  }
  func.func @transform_1(%arg0: i32) -> (i32, i32) {
    %c0_i32 = arith.constant 0 : i32
    %c0_i32_0 = arith.constant 0 : i32
    %c0_i32_1 = arith.constant 0 : i32
    return %c0_i32, %c0_i32_0 : i32, i32
  }
  func.func @transform_2(%arg0: i32) -> (i32, i32) {
    %c0_i32 = arith.constant 0 : i32
    %c0_i32_0 = arith.constant 0 : i32
    %c0_i32_1 = arith.constant 0 : i32
    return %c0_i32, %c0_i32_0 : i32, i32
  }
  func.func @transform_3(%arg0: i32) -> (i32, i32) {
    %c0_i32 = arith.constant 0 : i32
    %c0_i32_0 = arith.constant 0 : i32
    %c0_i32_1 = arith.constant 0 : i32
    return %c0_i32, %c0_i32_0 : i32, i32
  }
  func.func @transform_4(%arg0: i32) -> (i32, i32) {
    %c0_i32 = arith.constant 0 : i32
    %c0_i32_0 = arith.constant 0 : i32
    %c0_i32_1 = arith.constant 0 : i32
    return %c0_i32, %c0_i32_0 : i32, i32
  }
  func.func @transform_5(%arg0: i32) -> (i32, i32) {
    %c0_i32 = arith.constant 0 : i32
    %c0_i32_0 = arith.constant 0 : i32
    %c0_i32_1 = arith.constant 0 : i32
    return %c0_i32, %c0_i32_0 : i32, i32
  }
  func.func @transform_6(%arg0: i32) -> (i32, i32) {
    %c0_i32 = arith.constant 0 : i32
    %c0_i32_0 = arith.constant 0 : i32
    %c0_i32_1 = arith.constant 0 : i32
    return %c0_i32, %c0_i32_0 : i32, i32
  }
  func.func @transform_7(%arg0: i32) -> (i32, i32) {
    %c0_i32 = arith.constant 0 : i32
    %c0_i32_0 = arith.constant 0 : i32
    %c0_i32_1 = arith.constant 0 : i32
    return %c0_i32, %c0_i32_0 : i32, i32
  }
  func.func @transform_8(%arg0: i32) -> (i32, i32) {
    %c0_i32 = arith.constant 0 : i32
    %c0_i32_0 = arith.constant 0 : i32
    %c0_i32_1 = arith.constant 0 : i32
    return %c0_i32, %c0_i32_0 : i32, i32
  }
  func.func @transform_9(%arg0: i32) -> (i32, i32) {
    %c0_i32 = arith.constant 0 : i32
    %c0_i32_0 = arith.constant 0 : i32
    %c0_i32_1 = arith.constant 0 : i32
    return %c0_i32, %c0_i32_0 : i32, i32
  }
  func.func @transform_10(%arg0: i32) -> (i32, i32) {
    %c0_i32 = arith.constant 0 : i32
    %c0_i32_0 = arith.constant 0 : i32
    %c0_i32_1 = arith.constant 0 : i32
    return %c0_i32, %c0_i32_0 : i32, i32
  }
  func.func @transform_11(%arg0: i32) -> (i32, i32, i32) {
    %c0_i32 = arith.constant 0 : i32
    %c0_i32_0 = arith.constant 0 : i32
    %c0_i32_1 = arith.constant 0 : i32
    return %arg0, %c0_i32, %c0_i32_0 : i32, i32, i32
  }
}

</mosaic_0001>

<llo_original>
// kernel: res_dwconv2_block.1
$region0: #{res_dwconv2_block.1}
  #allocation0 [shape = 'u32[]', space=smem, size = 0x4, offset = 0x4, fixed_abs, tag = 'smem constant byte address 0x4 - core index']
  #allocation1 [shape = 'u32[144,128]{1,0:T(1,128)}', space=vmem, size = 0x12000, scoped, tag = 'internal scratch']
  %s0 = inlined_call_operand.vmem [shape: f32[2,32,256], index: 0, kind: input, shape index: {}]
  %s1 = inlined_call_operand.vmem [shape: f32[1,256], index: 1, kind: input, shape index: {}]
  %s2 = inlined_call_operand.vmem [shape: f32[1,256], index: 2, kind: input, shape index: {}]
  %s3 = inlined_call_operand.vmem [shape: f32[32,9], index: 3, kind: input, shape index: {}]
  %s4 = inlined_call_operand.vmem [shape: f32[32,32], index: 4, kind: input, shape index: {}]
  %s5 = inlined_call_operand.vmem [shape: f32[32,1], index: 5, kind: input, shape index: {}]
  %s6 = inlined_call_operand.vmem [shape: f32[32,9], index: 6, kind: input, shape index: {}]
  %s7 = inlined_call_operand.vmem [shape: f32[32,32], index: 7, kind: input, shape index: {}]
  %s8 = inlined_call_operand.vmem [shape: f32[32,1], index: 8, kind: input, shape index: {}]
  %s9 = inlined_call_operand.vmem [shape: f32[32,32], index: 9, kind: input, shape index: {}]
  %s10 = inlined_call_operand.vmem [shape: f32[32,1], index: 10, kind: input, shape index: {}]
  %s11 = inlined_call_operand.vmem [shape: f32[2,32,256], index: 11, kind: output, shape index: {}]
  %s12 = sld [smem:[#allocation0]]
  $region77: #{res_dwconv2_block.1} parent=0
    _
  %s14 = ssub.s32 1, %s12
  %s15 = scalar_select 0, %s14, %s12
  loop: start=0, step=1, limit=4
  $region2: #{res_dwconv2_block.1} parent=0 // loop_pre_header
    _
  $region3: #{res_dwconv2_block.1} parent=0 // loop_header
    %s17 = sphi 0, %s21
    %p18 = scmp.ge.s32.totalorder %s17, 4
    %s27 = sphi 0, %s29
    %s30 = sphi 0, %s27
    %s31 = sphi 0, %s30
    %s47 = sphi 0, %s31
    %s51 = sphi 0, %s51
    %s53 = sphi 0, %s51
    %s54 = sphi 0, %s53
    %s68 = sphi 0, %s54
    %s72 = sphi 0, %s72
    %s74 = sphi 0, %s72
    %s75 = sphi 0, %s74
    %s89 = sphi 0, %s75
    %s93 = sphi 0, %s93
    %s95 = sphi 0, %s93
    %s96 = sphi 0, %s95
    %s110 = sphi 0, %s96
    %s114 = sphi 0, %s114
    %s116 = sphi 0, %s114
    %s117 = sphi 0, %s116
    %s131 = sphi 0, %s117
    %s135 = sphi 0, %s135
    %s137 = sphi 0, %s135
    %s138 = sphi 0, %s137
    %s152 = sphi 0, %s138
    %s156 = sphi 0, %s156
    %s158 = sphi 0, %s156
    %s159 = sphi 0, %s158
    %s173 = sphi 0, %s159
    %s177 = sphi 0, %s177
    %s179 = sphi 0, %s177
    %s180 = sphi 0, %s179
    %s194 = sphi 0, %s180
    %s198 = sphi 0, %s198
    %s200 = sphi 0, %s198
    %s201 = sphi 0, %s200
    %s215 = sphi 0, %s201
    %s219 = sphi 0, %s219
    %s221 = sphi 0, %s219
    %s222 = sphi 0, %s221
    %s236 = sphi 0, %s222
    %s240 = sphi 0, %s240
    %s242 = sphi 0, %s240
    %s243 = sphi 0, %s242
    %s257 = sphi 0, %s243
    %s263 = sphi 0, %s265
    %s266 = sphi 0, %s263
    %s267 = sphi 0, %s266
    %s283 = sphi 0, %s267
  $region4: #{res_dwconv2_block.1} parent=0 // loop_header_branch
    %20 = sbr.rel (%p18) target = $region8
  $region5: #{res_dwconv2_block.1} parent=0 // loop_body
    %s22 = ssub.s32 %s17, 1
    %s23 = ssub.s32 %s17, 2
    %s24 = sadd.s32 %s17, 1
    %s25 = ssub.s32 %s17, %s24
    %p26 = scmp.eq.s32.totalorder %s25, 0
    %s28 = sadd.s32 %s27, 1
    %s29 = scalar_select %p26, %s27, %s28
    %p32 = pneg %p26
    %p33 = scmp.eq.s32.totalorder %s17, 1
    %p34 = por %p32, %p33
    %p35 = scmp.ne.s32.totalorder %s27, %s30
    %p36 = scmp.eq.s32.totalorder %s17, 0
    %p37 = por %p35, %p36
    %p38 = scmp.ne.s32.totalorder %s27, %s30
    %p39 = scmp.eq.s32.totalorder %s22, 1
    %p40 = por %p38, %p39
    %p41 = scmp.ne.s32.totalorder %s30, %s31
    %p42 = scmp.eq.s32.totalorder %s22, 0
    %p43 = por %p41, %p42
    %p44 = scmp.ne.s32.totalorder %s30, %s31
    %p45 = scmp.eq.s32.totalorder %s23, 1
    %p46 = por %p44, %p45
    %p48 = scmp.ne.s32.totalorder %s31, %s47
    %p49 = scmp.eq.s32.totalorder %s23, 0
    %p50 = por %p48, %p49
    %s52 = sadd.s32 %s51, 1
    %p55 = scmp.eq.s32.totalorder %s17, 1
    %p56 = scmp.ne.s32.totalorder %s51, %s53
    %p57 = scmp.eq.s32.totalorder %s17, 0
    %p58 = por %p56, %p57
    %p59 = scmp.ne.s32.totalorder %s51, %s53
    %p60 = scmp.eq.s32.totalorder %s22, 1
    %p61 = por %p59, %p60
    %p62 = scmp.ne.s32.totalorder %s53, %s54
    %p63 = scmp.eq.s32.totalorder %s22, 0
    %p64 = por %p62, %p63
    %p65 = scmp.ne.s32.totalorder %s53, %s54
    %p66 = scmp.eq.s32.totalorder %s23, 1
    %p67 = por %p65, %p66
    %p69 = scmp.ne.s32.totalorder %s54, %s68
    %p70 = scmp.eq.s32.totalorder %s23, 0
    %p71 = por %p69, %p70
    %s73 = sadd.s32 %s72, 1
    %p76 = scmp.eq.s32.totalorder %s17, 1
    %p77 = scmp.ne.s32.totalorder %s72, %s74
    %p78 = scmp.eq.s32.totalorder %s17, 0
    %p79 = por %p77, %p78
    %p80 = scmp.ne.s32.totalorder %s72, %s74
    %p81 = scmp.eq.s32.totalorder %s22, 1
    %p82 = por %p80, %p81
    %p83 = scmp.ne.s32.totalorder %s74, %s75
    %p84 = scmp.eq.s32.totalorder %s22, 0
    %p85 = por %p83, %p84
    %p86 = scmp.ne.s32.totalorder %s74, %s75
    %p87 = scmp.eq.s32.totalorder %s23, 1
    %p88 = por %p86, %p87
    %p90 = scmp.ne.s32.totalorder %s75, %s89
    %p91 = scmp.eq.s32.totalorder %s23, 0
    %p92 = por %p90, %p91
    %s94 = sadd.s32 %s93, 1
    %p97 = scmp.eq.s32.totalorder %s17, 1
    %p98 = scmp.ne.s32.totalorder %s93, %s95
    %p99 = scmp.eq.s32.totalorder %s17, 0
    %p100 = por %p98, %p99
    %p101 = scmp.ne.s32.totalorder %s93, %s95
    %p102 = scmp.eq.s32.totalorder %s22, 1
    %p103 = por %p101, %p102
    %p104 = scmp.ne.s32.totalorder %s95, %s96
    %p105 = scmp.eq.s32.totalorder %s22, 0
    %p106 = por %p104, %p105
    %p107 = scmp.ne.s32.totalorder %s95, %s96
    %p108 = scmp.eq.s32.totalorder %s23, 1
    %p109 = por %p107, %p108
    %p111 = scmp.ne.s32.totalorder %s96, %s110
    %p112 = scmp.eq.s32.totalorder %s23, 0
    %p113 = por %p111, %p112
    %s115 = sadd.s32 %s114, 1
    %p118 = scmp.eq.s32.totalorder %s17, 1
    %p119 = scmp.ne.s32.totalorder %s114, %s116
    %p120 = scmp.eq.s32.totalorder %s17, 0
    %p121 = por %p119, %p120
    %p122 = scmp.ne.s32.totalorder %s114, %s116
    %p123 = scmp.eq.s32.totalorder %s22, 1
    %p124 = por %p122, %p123
    %p125 = scmp.ne.s32.totalorder %s116, %s117
    %p126 = scmp.eq.s32.totalorder %s22, 0
    %p127 = por %p125, %p126
    %p128 = scmp.ne.s32.totalorder %s116, %s117
    %p129 = scmp.eq.s32.totalorder %s23, 1
    %p130 = por %p128, %p129
    %p132 = scmp.ne.s32.totalorder %s117, %s131
    %p133 = scmp.eq.s32.totalorder %s23, 0
    %p134 = por %p132, %p133
    %s136 = sadd.s32 %s135, 1
    %p139 = scmp.eq.s32.totalorder %s17, 1
    %p140 = scmp.ne.s32.totalorder %s135, %s137
    %p141 = scmp.eq.s32.totalorder %s17, 0
    %p142 = por %p140, %p141
    %p143 = scmp.ne.s32.totalorder %s135, %s137
    %p144 = scmp.eq.s32.totalorder %s22, 1
    %p145 = por %p143, %p144
    %p146 = scmp.ne.s32.totalorder %s137, %s138
    %p147 = scmp.eq.s32.totalorder %s22, 0
    %p148 = por %p146, %p147
    %p149 = scmp.ne.s32.totalorder %s137, %s138
    %p150 = scmp.eq.s32.totalorder %s23, 1
    %p151 = por %p149, %p150
    %p153 = scmp.ne.s32.totalorder %s138, %s152
    %p154 = scmp.eq.s32.totalorder %s23, 0
    %p155 = por %p153, %p154
    %s157 = sadd.s32 %s156, 1
    %p160 = scmp.eq.s32.totalorder %s17, 1
    %p161 = scmp.ne.s32.totalorder %s156, %s158
    %p162 = scmp.eq.s32.totalorder %s17, 0
    %p163 = por %p161, %p162
    %p164 = scmp.ne.s32.totalorder %s156, %s158
    %p165 = scmp.eq.s32.totalorder %s22, 1
    %p166 = por %p164, %p165
    %p167 = scmp.ne.s32.totalorder %s158, %s159
    %p168 = scmp.eq.s32.totalorder %s22, 0
    %p169 = por %p167, %p168
    %p170 = scmp.ne.s32.totalorder %s158, %s159
    %p171 = scmp.eq.s32.totalorder %s23, 1
    %p172 = por %p170, %p171
    %p174 = scmp.ne.s32.totalorder %s159, %s173
    %p175 = scmp.eq.s32.totalorder %s23, 0
    %p176 = por %p174, %p175
    %s178 = sadd.s32 %s177, 1
    %p181 = scmp.eq.s32.totalorder %s17, 1
    %p182 = scmp.ne.s32.totalorder %s177, %s179
    %p183 = scmp.eq.s32.totalorder %s17, 0
    %p184 = por %p182, %p183
    %p185 = scmp.ne.s32.totalorder %s177, %s179
    %p186 = scmp.eq.s32.totalorder %s22, 1
    %p187 = por %p185, %p186
    %p188 = scmp.ne.s32.totalorder %s179, %s180
    %p189 = scmp.eq.s32.totalorder %s22, 0
    %p190 = por %p188, %p189
    %p191 = scmp.ne.s32.totalorder %s179, %s180
    %p192 = scmp.eq.s32.totalorder %s23, 1
    %p193 = por %p191, %p192
    %p195 = scmp.ne.s32.totalorder %s180, %s194
    %p196 = scmp.eq.s32.totalorder %s23, 0
    %p197 = por %p195, %p196
    %s199 = sadd.s32 %s198, 1
    %p202 = scmp.eq.s32.totalorder %s17, 1
    %p203 = scmp.ne.s32.totalorder %s198, %s200
    %p204 = scmp.eq.s32.totalorder %s17, 0
    %p205 = por %p203, %p204
    %p206 = scmp.ne.s32.totalorder %s198, %s200
    %p207 = scmp.eq.s32.totalorder %s22, 1
    %p208 = por %p206, %p207
    %p209 = scmp.ne.s32.totalorder %s200, %s201
    %p210 = scmp.eq.s32.totalorder %s22, 0
    %p211 = por %p209, %p210
    %p212 = scmp.ne.s32.totalorder %s200, %s201
    %p213 = scmp.eq.s32.totalorder %s23, 1
    %p214 = por %p212, %p213
    %p216 = scmp.ne.s32.totalorder %s201, %s215
    %p217 = scmp.eq.s32.totalorder %s23, 0
    %p218 = por %p216, %p217
    %s220 = sadd.s32 %s219, 1
    %p223 = scmp.eq.s32.totalorder %s17, 1
    %p224 = scmp.ne.s32.totalorder %s219, %s221
    %p225 = scmp.eq.s32.totalorder %s17, 0
    %p226 = por %p224, %p225
    %p227 = scmp.ne.s32.totalorder %s219, %s221
    %p228 = scmp.eq.s32.totalorder %s22, 1
    %p229 = por %p227, %p228
    %p230 = scmp.ne.s32.totalorder %s221, %s222
    %p231 = scmp.eq.s32.totalorder %s22, 0
    %p232 = por %p230, %p231
    %p233 = scmp.ne.s32.totalorder %s221, %s222
    %p234 = scmp.eq.s32.totalorder %s23, 1
    %p235 = por %p233, %p234
    %p237 = scmp.ne.s32.totalorder %s222, %s236
    %p238 = scmp.eq.s32.totalorder %s23, 0
    %p239 = por %p237, %p238
    %s241 = sadd.s32 %s240, 1
    %p244 = scmp.eq.s32.totalorder %s17, 1
    %p245 = scmp.ne.s32.totalorder %s240, %s242
    %p246 = scmp.eq.s32.totalorder %s17, 0
    %p247 = por %p245, %p246
    %p248 = scmp.ne.s32.totalorder %s240, %s242
    %p249 = scmp.eq.s32.totalorder %s22, 1
    %p250 = por %p248, %p249
    %p251 = scmp.ne.s32.totalorder %s242, %s243
    %p252 = scmp.eq.s32.totalorder %s22, 0
    %p253 = por %p251, %p252
    %p254 = scmp.ne.s32.totalorder %s242, %s243
    %p255 = scmp.eq.s32.totalorder %s23, 1
    %p256 = por %p254, %p255
    %p258 = scmp.ne.s32.totalorder %s243, %s257
    %p259 = scmp.eq.s32.totalorder %s23, 0
    %p260 = por %p258, %p259
    %s261 = ssub.s32 %s17, %s24
    %p262 = scmp.eq.s32.totalorder %s261, 0
    %s264 = sadd.s32 %s263, 1
    %s265 = scalar_select %p262, %s263, %s264
    %p268 = pneg %p262
    %p269 = scmp.eq.s32.totalorder %s17, 1
    %p270 = por %p268, %p269
    %p271 = scmp.ne.s32.totalorder %s263, %s266
    %p272 = scmp.eq.s32.totalorder %s17, 0
    %p273 = por %p271, %p272
    %p274 = scmp.ne.s32.totalorder %s263, %s266
    %p275 = scmp.eq.s32.totalorder %s22, 1
    %p276 = por %p274, %p275
    %p277 = scmp.ne.s32.totalorder %s266, %s267
    %p278 = scmp.eq.s32.totalorder %s22, 0
    %p279 = por %p277, %p278
    %p280 = scmp.ne.s32.totalorder %s266, %s267
    %p281 = scmp.eq.s32.totalorder %s23, 1
    %p282 = por %p280, %p281
    %p284 = scmp.ne.s32.totalorder %s267, %s283
    %p285 = scmp.eq.s32.totalorder %s23, 0
    %p286 = por %p284, %p285
    %p287 = scmp.le.s32.totalorder 1, %s17
    %p288 = scmp.lt.s32.totalorder %s17, 3
    %p289 = pnand %p287, %p288
    %p290 = pneg %p289
    // Predicated region
    $region9: #{res_dwconv2_block.1} parent=5 // pred_check
      _
    $region10: #{res_dwconv2_block.1} parent=5 // pred_check_branch
      %292 = sbr.rel (%p289) target = $region12
    $region11: #{res_dwconv2_block.1} parent=5 // pred_region
      %s293 = ssub.s32 %s17, 1
      // Predicated region
      $region13: #{res_dwconv2_block.1} parent=11 // pred_check
        %p294 = pneg %p64
      $region14: #{res_dwconv2_block.1} parent=11 // pred_check_branch
        %296 = sbr.rel (%p294) target = $region16
      $region15: #{res_dwconv2_block.1} parent=11 // pred_region
        _
      $region16: #{res_dwconv2_block.1} parent=11 // pred_fallthru
        _
      // Predicated region
      $region17: #{res_dwconv2_block.1} parent=11 // pred_check
        %p297 = pneg %p85
      $region18: #{res_dwconv2_block.1} parent=11 // pred_check_branch
        %299 = sbr.rel (%p297) target = $region20
      $region19: #{res_dwconv2_block.1} parent=11 // pred_region
        _
      $region20: #{res_dwconv2_block.1} parent=11 // pred_fallthru
        _
      // Predicated region
      $region21: #{res_dwconv2_block.1} parent=11 // pred_check
        %p300 = pneg %p106
      $region22: #{res_dwconv2_block.1} parent=11 // pred_check_branch
        %302 = sbr.rel (%p300) target = $region24
      $region23: #{res_dwconv2_block.1} parent=11 // pred_region
        _
      $region24: #{res_dwconv2_block.1} parent=11 // pred_fallthru
        _
      // Predicated region
      $region25: #{res_dwconv2_block.1} parent=11 // pred_check
        %p303 = pneg %p127
      $region26: #{res_dwconv2_block.1} parent=11 // pred_check_branch
        %305 = sbr.rel (%p303) target = $region28
      $region27: #{res_dwconv2_block.1} parent=11 // pred_region
        _
      $region28: #{res_dwconv2_block.1} parent=11 // pred_fallthru
        _
      // Predicated region
      $region29: #{res_dwconv2_block.1} parent=11 // pred_check
        %p306 = pneg %p148
      $region30: #{res_dwconv2_block.1} parent=11 // pred_check_branch
        %308 = sbr.rel (%p306) target = $region32
      $region31: #{res_dwconv2_block.1} parent=11 // pred_region
        _
      $region32: #{res_dwconv2_block.1} parent=11 // pred_fallthru
        _
      // Predicated region
      $region33: #{res_dwconv2_block.1} parent=11 // pred_check
        %p309 = pneg %p169
      $region34: #{res_dwconv2_block.1} parent=11 // pred_check_branch
        %311 = sbr.rel (%p309) target = $region36
      $region35: #{res_dwconv2_block.1} parent=11 // pred_region
        _
      $region36: #{res_dwconv2_block.1} parent=11 // pred_fallthru
        _
      // Predicated region
      $region37: #{res_dwconv2_block.1} parent=11 // pred_check
        %p312 = pneg %p190
      $region38: #{res_dwconv2_block.1} parent=11 // pred_check_branch
        %314 = sbr.rel (%p312) target = $region40
      $region39: #{res_dwconv2_block.1} parent=11 // pred_region
        _
      $region40: #{res_dwconv2_block.1} parent=11 // pred_fallthru
        _
      // Predicated region
      $region41: #{res_dwconv2_block.1} parent=11 // pred_check
        %p315 = pneg %p211
      $region42: #{res_dwconv2_block.1} parent=11 // pred_check_branch
        %317 = sbr.rel (%p315) target = $region44
      $region43: #{res_dwconv2_block.1} parent=11 // pred_region
        _
      $region44: #{res_dwconv2_block.1} parent=11 // pred_fallthru
        _
      // Predicated region
      $region45: #{res_dwconv2_block.1} parent=11 // pred_check
        %p318 = pneg %p232
      $region46: #{res_dwconv2_block.1} parent=11 // pred_check_branch
        %320 = sbr.rel (%p318) target = $region48
      $region47: #{res_dwconv2_block.1} parent=11 // pred_region
        _
      $region48: #{res_dwconv2_block.1} parent=11 // pred_fallthru
        _
      // Predicated region
      $region49: #{res_dwconv2_block.1} parent=11 // pred_check
        %p321 = pneg %p253
      $region50: #{res_dwconv2_block.1} parent=11 // pred_check_branch
        %323 = sbr.rel (%p321) target = $region52
      $region51: #{res_dwconv2_block.1} parent=11 // pred_region
        _
      $region52: #{res_dwconv2_block.1} parent=11 // pred_fallthru
        _
    $region12: #{res_dwconv2_block.1} parent=5 // pred_fallthru
      _
    %p324 = scmp.lt.s32.totalorder %s17, 2
    // Predicated region
    $region53: #{res_dwconv2_block.1} parent=5 // pred_check
      %p325 = pneg %p324
    $region54: #{res_dwconv2_block.1} parent=5 // pred_check_branch
      %327 = sbr.rel (%p325) target = $region56
    $region55: #{res_dwconv2_block.1} parent=5 // pred_region
      // Predicated region
      $region57: #{res_dwconv2_block.1} parent=55 // pred_check
        %p328 = pneg %p37
      $region58: #{res_dwconv2_block.1} parent=55 // pred_check_branch
        %330 = sbr.rel (%p328) target = $region60
      $region59: #{res_dwconv2_block.1} parent=55 // pred_region
        %p331 = scmp.lt.s32.totalorder %s17, 1
        %s332 = scalar_select %p331, %s17, 1
        %s333 = smul.addr %s332, 8
        %s334 = smul.addr %s333, 8
        %s335 = scalar_lea.vmem %s0, %s334
      $region60: #{res_dwconv2_block.1} parent=55 // pred_fallthru
        _
    $region56: #{res_dwconv2_block.1} parent=5 // pred_fallthru
      _
    %p336 = scmp.le.s32.totalorder 1, %s17
    %p337 = scmp.lt.s32.totalorder %s17, 3
    %p338 = pnand %p336, %p337
    %p339 = pneg %p338
    // Predicated region
    $region61: #{res_dwconv2_block.1} parent=5 // pred_check
      _
    $region62: #{res_dwconv2_block.1} parent=5 // pred_check_branch
      %341 = sbr.rel (%p338) target = $region64
    $region63: #{res_dwconv2_block.1} parent=5 // pred_region
      %s342 = ssub.s32 %s17, 1
      %p343 = scmp.lt.s32.totalorder %s22, 1
      %s344 = scalar_select %p343, %s22, 1
      %s345 = smul.addr %s344, 8
      %s346 = smul.addr %s345, 8
      %s347 = scalar_lea.vmem %s0, %s346
      %p348 = pneg %p43
      %p349 = pneg %p40
      %p350 = pneg %p64
      %p351 = pneg %p61
      %p352 = pneg %p85
      %p353 = pneg %p82
      %p354 = pneg %p106
      %p355 = pneg %p103
      %p356 = pneg %p127
      %p357 = pneg %p124
      %p358 = pneg %p148
      %p359 = pneg %p145
      %p360 = pneg %p169
      %p361 = pneg %p166
      %p362 = pneg %p190
      %p363 = pneg %p187
      %p364 = pneg %p211
      %p365 = pneg %p208
      %p366 = pneg %p232
      %p367 = pneg %p229
      %p368 = pneg %p253
      %p369 = pneg %p250
      %p370 = pneg %p279
      %p371 = pneg %p276
      %p372 = scmp.lt.s32.totalorder %s22, 1
      %s373 = scalar_select %p372, %s22, 1
      %s374 = smul.addr %s373, 8
      %s375 = smul.addr %s374, 8
      %s376 = scalar_lea.vmem %s11, %s375
      %p377 = scmp.lt.s32.totalorder %s22, 1
      %s378 = scalar_select %p377, %s22, 1
      %s379 = smul.addr %s378, 8
      %s380 = smul.addr %s379, 8
      %s381 = scalar_lea.vmem %s0, %s380
      %p382 = scmp.lt.s32.totalorder %s22, 1
      %s383 = scalar_select %p382, %s22, 1
      %s384 = smul.addr %s383, 8
      %s385 = smul.addr %s384, 8
      %s386 = scalar_lea.vmem %s11, %s385
      %v387 = vld [vmem:[%s381] sm:$0xff]
      %v388 = vld [vmem:[%s381 + $0x8] sm:$0xff]
      %v389 = vld [vmem:[%s381 + $0x10] sm:$0xff]
      %v390 = vld [vmem:[%s381 + $0x18] sm:$0xff]
      %v391 = vld [vmem:[%s381 + $0x20] sm:$0xff]
      %v392 = vld [vmem:[%s381 + $0x28] sm:$0xff]
      %v393 = vld [vmem:[%s381 + $0x30] sm:$0xff]
      %v394 = vld [vmem:[%s381 + $0x38] sm:$0xff]
      %v395 = vld [vmem:[%s1] sm:$0x3]
      %v396 = vld [vmem:[%s2] sm:$0x3]
      %v397 = vld [vmem:[%s3] sm:$0xff]
      %v398 = vld [vmem:[%s3 + $0x8] sm:$0xff]
      %v399 = vld [vmem:[%s3 + $0x10] sm:$0xff]
      %v400 = vld [vmem:[%s3 + $0x18] sm:$0xff]
      %v402 = vlaneseq
      %v403 = vshrl.u32 %v402, 7
      %v404 = vsub.s32 0, %v403
      %v405 = vrot.slane %v395, %v404
      %v406 = vlaneseq
      %v407 = vshrl.u32 %v406, 7
      %v408 = vsub.s32 1, %v407
      %v409 = vrot.slane %v395, %v408
      %410 = vrot.lane.b32.xlu0 %v405, 111
      %v411 = vpop.permute.xlu0 %410
      %412 = vrot.lane.b32.xlu0 %v409, 111
      %v413 = vpop.permute.xlu0 %412
      %vm414 = vcmask 908288
      %v415 = vsel %vm414, %v411, %v413
      %v419 = vmul.f32 %v411, 0.0
      %v420 = vmul.f32 %v387, %v415
      %v421 = vmul.f32 %v388, %v413
      %v422 = vmul.f32 %v389, %v415
      %v423 = vmul.f32 %v390, %v413
      %v424 = vmul.f32 %v391, %v415
      %v425 = vmul.f32 %v392, %v413
      %v426 = vmul.f32 %v393, %v415
      %v427 = vmul.f32 %v394, %v413
      %429 = vset.pattern.permute.xlu0 0
      %430 = vperm.xlu0 %429, %v397
      %v431 = vpop.permute.xlu0 %430
      %434 = vset.pattern.permute.xlu0 0
      %435 = vperm.xlu0 %434, %v398
      %v436 = vpop.permute.xlu0 %435
      %439 = vset.pattern.permute.xlu0 0
      %440 = vperm.xlu0 %439, %v399
      %v441 = vpop.permute.xlu0 %440
      %444 = vset.pattern.permute.xlu0 0
      %445 = vperm.xlu0 %444, %v400
      %v446 = vpop.permute.xlu0 %445
      %v448 = vmul.f32 %v419, %v431
      %v449 = vmul.f32 %v420, %v431
      %v450 = vmul.f32 %v421, %v431
      %v451 = vmul.f32 %v419, %v436
      %v452 = vmul.f32 %v422, %v436
      %v453 = vmul.f32 %v423, %v436
      %v454 = vmul.f32 %v419, %v441
      %v455 = vmul.f32 %v424, %v441
      %v456 = vmul.f32 %v425, %v441
      %v457 = vmul.f32 %v419, %v446
      %v458 = vmul.f32 %v426, %v446
      %v459 = vmul.f32 %v427, %v446
      %v460 = vadd.f32 %v448, 0.0
      %v461 = vadd.f32 %v449, 0.0
      %v462 = vadd.f32 %v450, 0.0
      %v463 = vadd.f32 %v451, 0.0
      %v464 = vadd.f32 %v452, 0.0
      %v465 = vadd.f32 %v453, 0.0
      %v466 = vadd.f32 %v454, 0.0
      %v467 = vadd.f32 %v455, 0.0
      %v468 = vadd.f32 %v456, 0.0
      %v469 = vadd.f32 %v457, 0.0
      %v470 = vadd.f32 %v458, 0.0
      %v471 = vadd.f32 %v459, 0.0
      %472 = vset.pattern.permute.xlu0 1
      %473 = vperm.xlu0 %472, %v397
      %v474 = vpop.permute.xlu0 %473
      %476 = vset.pattern.permute.xlu0 1
      %477 = vperm.xlu0 %476, %v398
      %v478 = vpop.permute.xlu0 %477
      %480 = vset.pattern.permute.xlu0 1
      %481 = vperm.xlu0 %480, %v399
      %v482 = vpop.permute.xlu0 %481
      %484 = vset.pattern.permute.xlu0 1
      %485 = vperm.xlu0 %484, %v400
      %v486 = vpop.permute.xlu0 %485
      %v488 = vmul.f32 %v474, 0.0
      %v489 = vmul.f32 %v387, %v474
      %v490 = vmul.f32 %v388, %v474
      %v491 = vmul.f32 %v478, 0.0
      %v492 = vmul.f32 %v389, %v478
      %v493 = vmul.f32 %v390, %v478
      %v494 = vmul.f32 %v482, 0.0
      %v495 = vmul.f32 %v391, %v482
      %v496 = vmul.f32 %v392, %v482
      %v497 = vmul.f32 %v486, 0.0
      %v498 = vmul.f32 %v393, %v486
      %v499 = vmul.f32 %v394, %v486
      %512 = vrot.lane.b32.xlu0 %v488, 127
      %v513 = vpop.permute.xlu0 %512
      %514 = vrot.lane.b32.xlu0 %v489, 127
      %v515 = vpop.permute.xlu0 %514
      %516 = vrot.lane.b32.xlu0 %v490, 127
      %v517 = vpop.permute.xlu0 %516
      %518 = vrot.lane.b32.xlu0 %v491, 127
      %v519 = vpop.permute.xlu0 %518
      %520 = vrot.lane.b32.xlu0 %v492, 127
      %v521 = vpop.permute.xlu0 %520
      %522 = vrot.lane.b32.xlu0 %v493, 127
      %v523 = vpop.permute.xlu0 %522
      %524 = vrot.lane.b32.xlu0 %v494, 127
      %v525 = vpop.permute.xlu0 %524
      %526 = vrot.lane.b32.xlu0 %v495, 127
      %v527 = vpop.permute.xlu0 %526
      %528 = vrot.lane.b32.xlu0 %v496, 127
      %v529 = vpop.permute.xlu0 %528
      %530 = vrot.lane.b32.xlu0 %v497, 127
      %v531 = vpop.permute.xlu0 %530
      %532 = vrot.lane.b32.xlu0 %v498, 127
      %v533 = vpop.permute.xlu0 %532
      %534 = vrot.lane.b32.xlu0 %v499, 127
      %v535 = vpop.permute.xlu0 %534
      %vm536 = vcmask 1039360
      %v537 = vsel %vm536, %v513, %v515
      %v538 = vsel %vm536, %v515, %v517
      %v539 = vsel %vm536, %v519, %v521
      %v540 = vsel %vm536, %v521, %v523
      %v541 = vsel %vm536, %v525, %v527
      %v542 = vsel %vm536, %v527, %v529
      %v543 = vsel %vm536, %v531, %v533
      %v544 = vsel %vm536, %v533, %v535
      %v557 = vadd.f32 %v460, %v537
      %v558 = vadd.f32 %v461, %v538
      %v559 = vadd.f32 %v462, %v517
      %v560 = vadd.f32 %v463, %v539
      %v561 = vadd.f32 %v464, %v540
      %v562 = vadd.f32 %v465, %v523
      %v563 = vadd.f32 %v466, %v541
      %v564 = vadd.f32 %v467, %v542
      %v565 = vadd.f32 %v468, %v529
      %v566 = vadd.f32 %v469, %v543
      %v567 = vadd.f32 %v470, %v544
      %v568 = vadd.f32 %v471, %v535
      %v570 = vlaneseq
      %v571 = vshrl.u32 %v570, 7
      %v572 = vsub.s32 0, %v571
      %v573 = vrot.slane %v396, %v572
      %v574 = vlaneseq
      %v575 = vshrl.u32 %v574, 7
      %v576 = vsub.s32 1, %v575
      %v577 = vrot.slane %v396, %v576
      %578 = vrot.lane.b32.xlu0 %v573, 113
      %v579 = vpop.permute.xlu0 %578
      %580 = vrot.lane.b32.xlu0 %v577, 113
      %v581 = vpop.permute.xlu0 %580
      %vm582 = vcmask 924672
      %v583 = vsel %vm582, %v579, %v581
      %v587 = vmul.f32 %v579, 0.0
      %v588 = vmul.f32 %v387, %v583
      %v589 = vmul.f32 %v388, %v581
      %v590 = vmul.f32 %v389, %v583
      %v591 = vmul.f32 %v390, %v581
      %v592 = vmul.f32 %v391, %v583
      %v593 = vmul.f32 %v392, %v581
      %v594 = vmul.f32 %v393, %v583
      %v595 = vmul.f32 %v394, %v581
      %596 = vset.pattern.permute.xlu0 2
      %597 = vperm.xlu0 %596, %v397
      %v598 = vpop.permute.xlu0 %597
      %600 = vset.pattern.permute.xlu0 2
      %601 = vperm.xlu0 %600, %v398
      %v602 = vpop.permute.xlu0 %601
      %604 = vset.pattern.permute.xlu0 2
      %605 = vperm.xlu0 %604, %v399
      %v606 = vpop.permute.xlu0 %605
      %608 = vset.pattern.permute.xlu0 2
      %609 = vperm.xlu0 %608, %v400
      %v610 = vpop.permute.xlu0 %609
      %v612 = vmul.f32 %v587, %v598
      %v613 = vmul.f32 %v588, %v598
      %v614 = vmul.f32 %v589, %v598
      %v615 = vmul.f32 %v587, %v602
      %v616 = vmul.f32 %v590, %v602
      %v617 = vmul.f32 %v591, %v602
      %v618 = vmul.f32 %v587, %v606
      %v619 = vmul.f32 %v592, %v606
      %v620 = vmul.f32 %v593, %v606
      %v621 = vmul.f32 %v587, %v610
      %v622 = vmul.f32 %v594, %v610
      %v623 = vmul.f32 %v595, %v610
      %636 = vrot.lane.b32.xlu0 %v612, 126
      %v637 = vpop.permute.xlu0 %636
      %638 = vrot.lane.b32.xlu0 %v613, 126
      %v639 = vpop.permute.xlu0 %638
      %640 = vrot.lane.b32.xlu0 %v614, 126
      %v641 = vpop.permute.xlu0 %640
      %642 = vrot.lane.b32.xlu0 %v615, 126
      %v643 = vpop.permute.xlu0 %642
      %644 = vrot.lane.b32.xlu0 %v616, 126
      %v645 = vpop.permute.xlu0 %644
      %646 = vrot.lane.b32.xlu0 %v617, 126
      %v647 = vpop.permute.xlu0 %646
      %648 = vrot.lane.b32.xlu0 %v618, 126
      %v649 = vpop.permute.xlu0 %648
      %650 = vrot.lane.b32.xlu0 %v619, 126
      %v651 = vpop.permute.xlu0 %650
      %652 = vrot.lane.b32.xlu0 %v620, 126
      %v653 = vpop.permute.xlu0 %652
      %654 = vrot.lane.b32.xlu0 %v621, 126
      %v655 = vpop.permute.xlu0 %654
      %656 = vrot.lane.b32.xlu0 %v622, 126
      %v657 = vpop.permute.xlu0 %656
      %658 = vrot.lane.b32.xlu0 %v623, 126
      %v659 = vpop.permute.xlu0 %658
      %vm660 = vcmask 1031168
      %v661 = vsel %vm660, %v637, %v639
      %v662 = vsel %vm660, %v639, %v641
      %v663 = vsel %vm660, %v643, %v645
      %v664 = vsel %vm660, %v645, %v647
      %v665 = vsel %vm660, %v649, %v651
      %v666 = vsel %vm660, %v651, %v653
      %v667 = vsel %vm660, %v655, %v657
      %v668 = vsel %vm660, %v657, %v659
      %v681 = vadd.f32 %v557, %v661
      %v682 = vadd.f32 %v558, %v662
      %v683 = vadd.f32 %v559, %v641
      %v684 = vadd.f32 %v560, %v663
      %v685 = vadd.f32 %v561, %v664
      %v686 = vadd.f32 %v562, %v647
      %v687 = vadd.f32 %v563, %v665
      %v688 = vadd.f32 %v564, %v666
      %v689 = vadd.f32 %v565, %v653
      %v690 = vadd.f32 %v566, %v667
      %v691 = vadd.f32 %v567, %v668
      %v692 = vadd.f32 %v568, %v659
      %693 = vrot.lane.b32.xlu0 %v405, 127
      %v694 = vpop.permute.xlu0 %693
      %695 = vrot.lane.b32.xlu0 %v409, 127
      %v696 = vpop.permute.xlu0 %695
      %v697 = vsel %vm536, %v694, %v696
      %v701 = vmul.f32 %v694, 0.0
      %v702 = vmul.f32 %v387, %v697
      %v703 = vmul.f32 %v388, %v696
      %v704 = vmul.f32 %v389, %v697
      %v705 = vmul.f32 %v390, %v696
      %v706 = vmul.f32 %v391, %v697
      %v707 = vmul.f32 %v392, %v696
      %v708 = vmul.f32 %v393, %v697
      %v709 = vmul.f32 %v394, %v696
      %710 = vset.pattern.permute.xlu0 3
      %711 = vperm.xlu0 %710, %v397
      %v712 = vpop.permute.xlu0 %711
      %714 = vset.pattern.permute.xlu0 3
      %715 = vperm.xlu0 %714, %v398
      %v716 = vpop.permute.xlu0 %715
      %718 = vset.pattern.permute.xlu0 3
      %719 = vperm.xlu0 %718, %v399
      %v720 = vpop.permute.xlu0 %719
      %722 = vset.pattern.permute.xlu0 3
      %723 = vperm.xlu0 %722, %v400
      %v724 = vpop.permute.xlu0 %723
      %v726 = vmul.f32 %v701, %v712
      %v727 = vmul.f32 %v702, %v712
      %v728 = vmul.f32 %v703, %v712
      %v729 = vmul.f32 %v701, %v716
      %v730 = vmul.f32 %v704, %v716
      %v731 = vmul.f32 %v705, %v716
      %v732 = vmul.f32 %v701, %v720
      %v733 = vmul.f32 %v706, %v720
      %v734 = vmul.f32 %v707, %v720
      %v735 = vmul.f32 %v701, %v724
      %v736 = vmul.f32 %v708, %v724
      %v737 = vmul.f32 %v709, %v724
      %750 = vrot.lane.b32.xlu0 %v726, 112
      %v751 = vpop.permute.xlu0 %750
      %752 = vrot.lane.b32.xlu0 %v727, 112
      %v753 = vpop.permute.xlu0 %752
      %754 = vrot.lane.b32.xlu0 %v728, 112
      %v755 = vpop.permute.xlu0 %754
      %756 = vrot.lane.b32.xlu0 %v729, 112
      %v757 = vpop.permute.xlu0 %756
      %758 = vrot.lane.b32.xlu0 %v730, 112
      %v759 = vpop.permute.xlu0 %758
      %760 = vrot.lane.b32.xlu0 %v731, 112
      %v761 = vpop.permute.xlu0 %760
      %762 = vrot.lane.b32.xlu0 %v732, 112
      %v763 = vpop.permute.xlu0 %762
      %764 = vrot.lane.b32.xlu0 %v733, 112
      %v765 = vpop.permute.xlu0 %764
      %766 = vrot.lane.b32.xlu0 %v734, 112
      %v767 = vpop.permute.xlu0 %766
      %768 = vrot.lane.b32.xlu0 %v735, 112
      %v769 = vpop.permute.xlu0 %768
      %770 = vrot.lane.b32.xlu0 %v736, 112
      %v771 = vpop.permute.xlu0 %770
      %772 = vrot.lane.b32.xlu0 %v737, 112
      %v773 = vpop.permute.xlu0 %772
      %vm774 = vcmask 916480
      %v775 = vsel %vm774, %v751, %v753
      %v776 = vsel %vm774, %v753, %v755
      %v777 = vsel %vm774, %v757, %v759
      %v778 = vsel %vm774, %v759, %v761
      %v779 = vsel %vm774, %v763, %v765
      %v780 = vsel %vm774, %v765, %v767
      %v781 = vsel %vm774, %v769, %v771
      %v782 = vsel %vm774, %v771, %v773
      %v795 = vadd.f32 %v681, %v775
      %v796 = vadd.f32 %v682, %v776
      %v797 = vadd.f32 %v683, %v755
      %v798 = vadd.f32 %v684, %v777
      %v799 = vadd.f32 %v685, %v778
      %v800 = vadd.f32 %v686, %v761
      %v801 = vadd.f32 %v687, %v779
      %v802 = vadd.f32 %v688, %v780
      %v803 = vadd.f32 %v689, %v767
      %v804 = vadd.f32 %v690, %v781
      %v805 = vadd.f32 %v691, %v782
      %v806 = vadd.f32 %v692, %v773
      %807 = vset.pattern.permute.xlu0 4
      %808 = vperm.xlu0 %807, %v397
      %v809 = vpop.permute.xlu0 %808
      %811 = vset.pattern.permute.xlu0 4
      %812 = vperm.xlu0 %811, %v398
      %v813 = vpop.permute.xlu0 %812
      %815 = vset.pattern.permute.xlu0 4
      %816 = vperm.xlu0 %815, %v399
      %v817 = vpop.permute.xlu0 %816
      %819 = vset.pattern.permute.xlu0 4
      %820 = vperm.xlu0 %819, %v400
      %v821 = vpop.permute.xlu0 %820
      %v823 = vmul.f32 %v387, %v809
      %v824 = vmul.f32 %v388, %v809
      %v825 = vmul.f32 %v389, %v813
      %v826 = vmul.f32 %v390, %v813
      %v827 = vmul.f32 %v391, %v817
      %v828 = vmul.f32 %v392, %v817
      %v829 = vmul.f32 %v393, %v821
      %v830 = vmul.f32 %v394, %v821
      %839 = vrot.lane.b32.xlu0 %v823, 111
      %v840 = vpop.permute.xlu0 %839
      %841 = vrot.lane.b32.xlu0 %v824, 111
      %v842 = vpop.permute.xlu0 %841
      %843 = vrot.lane.b32.xlu0 %v825, 111
      %v844 = vpop.permute.xlu0 %843
      %845 = vrot.lane.b32.xlu0 %v826, 111
      %v846 = vpop.permute.xlu0 %845
      %847 = vrot.lane.b32.xlu0 %v827, 111
      %v848 = vpop.permute.xlu0 %847
      %849 = vrot.lane.b32.xlu0 %v828, 111
      %v850 = vpop.permute.xlu0 %849
      %851 = vrot.lane.b32.xlu0 %v829, 111
      %v852 = vpop.permute.xlu0 %851
      %853 = vrot.lane.b32.xlu0 %v830, 111
      %v854 = vpop.permute.xlu0 %853
      %v855 = vsel %vm414, %v840, %v842
      %v856 = vsel %vm414, %v844, %v846
      %v857 = vsel %vm414, %v848, %v850
      %v858 = vsel %vm414, %v852, %v854
      %v871 = vadd.f32 %v795, %v840
      %v872 = vadd.f32 %v796, %v855
      %v873 = vadd.f32 %v797, %v842
      %v874 = vadd.f32 %v798, %v844
      %v875 = vadd.f32 %v799, %v856
      %v876 = vadd.f32 %v800, %v846
      %v877 = vadd.f32 %v801, %v848
      %v878 = vadd.f32 %v802, %v857
      %v879 = vadd.f32 %v803, %v850
      %v880 = vadd.f32 %v804, %v852
      %v881 = vadd.f32 %v805, %v858
      %v882 = vadd.f32 %v806, %v854
      %883 = vrot.lane.b32.xlu0 %v573, 1
      %v884 = vpop.permute.xlu0 %883
      %885 = vrot.lane.b32.xlu0 %v577, 1
      %v886 = vpop.permute.xlu0 %885
      %vm887 = vcmask 7168
      %v888 = vsel %vm887, %v884, %v886
      %v892 = vmul.f32 %v387, %v884
      %v893 = vmul.f32 %v388, %v888
      %v894 = vmul.f32 %v886, 0.0
      %v895 = vmul.f32 %v389, %v884
      %v896 = vmul.f32 %v390, %v888
      %v897 = vmul.f32 %v391, %v884
      %v898 = vmul.f32 %v392, %v888
      %v899 = vmul.f32 %v393, %v884
      %v900 = vmul.f32 %v394, %v888
      %901 = vset.pattern.permute.xlu0 5
      %902 = vperm.xlu0 %901, %v397
      %v903 = vpop.permute.xlu0 %902
      %905 = vset.pattern.permute.xlu0 5
      %906 = vperm.xlu0 %905, %v398
      %v907 = vpop.permute.xlu0 %906
      %909 = vset.pattern.permute.xlu0 5
      %910 = vperm.xlu0 %909, %v399
      %v911 = vpop.permute.xlu0 %910
      %913 = vset.pattern.permute.xlu0 5
      %914 = vperm.xlu0 %913, %v400
      %v915 = vpop.permute.xlu0 %914
      %v917 = vmul.f32 %v892, %v903
      %v918 = vmul.f32 %v893, %v903
      %v919 = vmul.f32 %v894, %v903
      %v920 = vmul.f32 %v895, %v907
      %v921 = vmul.f32 %v896, %v907
      %v922 = vmul.f32 %v894, %v907
      %v923 = vmul.f32 %v897, %v911
      %v924 = vmul.f32 %v898, %v911
      %v925 = vmul.f32 %v894, %v911
      %v926 = vmul.f32 %v899, %v915
      %v927 = vmul.f32 %v900, %v915
      %v928 = vmul.f32 %v894, %v915
      %941 = vrot.lane.b32.xlu0 %v917, 110
      %v942 = vpop.permute.xlu0 %941
      %943 = vrot.lane.b32.xlu0 %v918, 110
      %v944 = vpop.permute.xlu0 %943
      %945 = vrot.lane.b32.xlu0 %v919, 110
      %v946 = vpop.permute.xlu0 %945
      %947 = vrot.lane.b32.xlu0 %v920, 110
      %v948 = vpop.permute.xlu0 %947
      %949 = vrot.lane.b32.xlu0 %v921, 110
      %v950 = vpop.permute.xlu0 %949
      %951 = vrot.lane.b32.xlu0 %v922, 110
      %v952 = vpop.permute.xlu0 %951
      %953 = vrot.lane.b32.xlu0 %v923, 110
      %v954 = vpop.permute.xlu0 %953
      %955 = vrot.lane.b32.xlu0 %v924, 110
      %v956 = vpop.permute.xlu0 %955
      %957 = vrot.lane.b32.xlu0 %v925, 110
      %v958 = vpop.permute.xlu0 %957
      %959 = vrot.lane.b32.xlu0 %v926, 110
      %v960 = vpop.permute.xlu0 %959
      %961 = vrot.lane.b32.xlu0 %v927, 110
      %v962 = vpop.permute.xlu0 %961
      %963 = vrot.lane.b32.xlu0 %v928, 110
      %v964 = vpop.permute.xlu0 %963
      %vm965 = vcmask 900096
      %v966 = vsel %vm965, %v942, %v944
      %v967 = vsel %vm965, %v944, %v946
      %v968 = vsel %vm965, %v948, %v950
      %v969 = vsel %vm965, %v950, %v952
      %v970 = vsel %vm965, %v954, %v956
      %v971 = vsel %vm965, %v956, %v958
      %v972 = vsel %vm965, %v960, %v962
      %v973 = vsel %vm965, %v962, %v964
      %v986 = vadd.f32 %v871, %v942
      %v987 = vadd.f32 %v872, %v966
      %v988 = vadd.f32 %v873, %v967
      %v989 = vadd.f32 %v874, %v948
      %v990 = vadd.f32 %v875, %v968
      %v991 = vadd.f32 %v876, %v969
      %v992 = vadd.f32 %v877, %v954
      %v993 = vadd.f32 %v878, %v970
      %v994 = vadd.f32 %v879, %v971
      %v995 = vadd.f32 %v880, %v960
      %v996 = vadd.f32 %v881, %v972
      %v997 = vadd.f32 %v882, %v973
      %998 = vrot.lane.b32.xlu0 %v405, 15
      %v999 = vpop.permute.xlu0 %998
      %1000 = vrot.lane.b32.xlu0 %v409, 15
      %v1001 = vpop.permute.xlu0 %1000
      %vm1002 = vcmask 121856
      %v1003 = vsel %vm1002, %v999, %v1001
      %v1007 = vmul.f32 %v387, %v999
      %v1008 = vmul.f32 %v388, %v1003
      %v1009 = vmul.f32 %v1001, 0.0
      %v1010 = vmul.f32 %v389, %v999
      %v1011 = vmul.f32 %v390, %v1003
      %v1012 = vmul.f32 %v391, %v999
      %v1013 = vmul.f32 %v392, %v1003
      %v1014 = vmul.f32 %v393, %v999
      %v1015 = vmul.f32 %v394, %v1003
      %1016 = vset.pattern.permute.xlu0 6
      %1017 = vperm.xlu0 %1016, %v397
      %v1018 = vpop.permute.xlu0 %1017
      %1020 = vset.pattern.permute.xlu0 6
      %1021 = vperm.xlu0 %1020, %v398
      %v1022 = vpop.permute.xlu0 %1021
      %1024 = vset.pattern.permute.xlu0 6
      %1025 = vperm.xlu0 %1024, %v399
      %v1026 = vpop.permute.xlu0 %1025
      %1028 = vset.pattern.permute.xlu0 6
      %1029 = vperm.xlu0 %1028, %v400
      %v1030 = vpop.permute.xlu0 %1029
      %v1032 = vmul.f32 %v1007, %v1018
      %v1033 = vmul.f32 %v1008, %v1018
      %v1034 = vmul.f32 %v1009, %v1018
      %v1035 = vmul.f32 %v1010, %v1022
      %v1036 = vmul.f32 %v1011, %v1022
      %v1037 = vmul.f32 %v1009, %v1022
      %v1038 = vmul.f32 %v1012, %v1026
      %v1039 = vmul.f32 %v1013, %v1026
      %v1040 = vmul.f32 %v1009, %v1026
      %v1041 = vmul.f32 %v1014, %v1030
      %v1042 = vmul.f32 %v1015, %v1030
      %v1043 = vmul.f32 %v1009, %v1030
      %1056 = vrot.lane.b32.xlu0 %v1032, 96
      %v1057 = vpop.permute.xlu0 %1056
      %1058 = vrot.lane.b32.xlu0 %v1033, 96
      %v1059 = vpop.permute.xlu0 %1058
      %1060 = vrot.lane.b32.xlu0 %v1034, 96
      %v1061 = vpop.permute.xlu0 %1060
      %1062 = vrot.lane.b32.xlu0 %v1035, 96
      %v1063 = vpop.permute.xlu0 %1062
      %1064 = vrot.lane.b32.xlu0 %v1036, 96
      %v1065 = vpop.permute.xlu0 %1064
      %1066 = vrot.lane.b32.xlu0 %v1037, 96
      %v1067 = vpop.permute.xlu0 %1066
      %1068 = vrot.lane.b32.xlu0 %v1038, 96
      %v1069 = vpop.permute.xlu0 %1068
      %1070 = vrot.lane.b32.xlu0 %v1039, 96
      %v1071 = vpop.permute.xlu0 %1070
      %1072 = vrot.lane.b32.xlu0 %v1040, 96
      %v1073 = vpop.permute.xlu0 %1072
      %1074 = vrot.lane.b32.xlu0 %v1041, 96
      %v1075 = vpop.permute.xlu0 %1074
      %1076 = vrot.lane.b32.xlu0 %v1042, 96
      %v1077 = vpop.permute.xlu0 %1076
      %1078 = vrot.lane.b32.xlu0 %v1043, 96
      %v1079 = vpop.permute.xlu0 %1078
      %vm1080 = vcmask 785408
      %v1081 = vsel %vm1080, %v1057, %v1059
      %v1082 = vsel %vm1080, %v1059, %v1061
      %v1083 = vsel %vm1080, %v1063, %v1065
      %v1084 = vsel %vm1080, %v1065, %v1067
      %v1085 = vsel %vm1080, %v1069, %v1071
      %v1086 = vsel %vm1080, %v1071, %v1073
      %v1087 = vsel %vm1080, %v1075, %v1077
      %v1088 = vsel %vm1080, %v1077, %v1079
      %v1101 = vadd.f32 %v986, %v1057
      %v1102 = vadd.f32 %v987, %v1081
      %v1103 = vadd.f32 %v988, %v1082
      %v1104 = vadd.f32 %v989, %v1063
      %v1105 = vadd.f32 %v990, %v1083
      %v1106 = vadd.f32 %v991, %v1084
      %v1107 = vadd.f32 %v992, %v1069
      %v1108 = vadd.f32 %v993, %v1085
      %v1109 = vadd.f32 %v994, %v1086
      %v1110 = vadd.f32 %v995, %v1075
      %v1111 = vadd.f32 %v996, %v1087
      %v1112 = vadd.f32 %v997, %v1088
      %1113 = vset.pattern.permute.xlu0 7
      %1114 = vperm.xlu0 %1113, %v397
      %v1115 = vpop.permute.xlu0 %1114
      %1117 = vset.pattern.permute.xlu0 7
      %1118 = vperm.xlu0 %1117, %v398
      %v1119 = vpop.permute.xlu0 %1118
      %1121 = vset.pattern.permute.xlu0 7
      %1122 = vperm.xlu0 %1121, %v399
      %v1123 = vpop.permute.xlu0 %1122
      %1125 = vset.pattern.permute.xlu0 7
      %1126 = vperm.xlu0 %1125, %v400
      %v1127 = vpop.permute.xlu0 %1126
      %v1129 = vmul.f32 %v387, %v1115
      %v1130 = vmul.f32 %v388, %v1115
      %v1131 = vmul.f32 %v1115, 0.0
      %v1132 = vmul.f32 %v389, %v1119
      %v1133 = vmul.f32 %v390, %v1119
      %v1134 = vmul.f32 %v1119, 0.0
      %v1135 = vmul.f32 %v391, %v1123
      %v1136 = vmul.f32 %v392, %v1123
      %v1137 = vmul.f32 %v1123, 0.0
      %v1138 = vmul.f32 %v393, %v1127
      %v1139 = vmul.f32 %v394, %v1127
      %v1140 = vmul.f32 %v1127, 0.0
      %1153 = vrot.lane.b32.xlu0 %v1129, 95
      %v1154 = vpop.permute.xlu0 %1153
      %1155 = vrot.lane.b32.xlu0 %v1130, 95
      %v1156 = vpop.permute.xlu0 %1155
      %1157 = vrot.lane.b32.xlu0 %v1131, 95
      %v1158 = vpop.permute.xlu0 %1157
      %1159 = vrot.lane.b32.xlu0 %v1132, 95
      %v1160 = vpop.permute.xlu0 %1159
      %1161 = vrot.lane.b32.xlu0 %v1133, 95
      %v1162 = vpop.permute.xlu0 %1161
      %1163 = vrot.lane.b32.xlu0 %v1134, 95
      %v1164 = vpop.permute.xlu0 %1163
      %1165 = vrot.lane.b32.xlu0 %v1135, 95
      %v1166 = vpop.permute.xlu0 %1165
      %1167 = vrot.lane.b32.xlu0 %v1136, 95
      %v1168 = vpop.permute.xlu0 %1167
      %1169 = vrot.lane.b32.xlu0 %v1137, 95
      %v1170 = vpop.permute.xlu0 %1169
      %1171 = vrot.lane.b32.xlu0 %v1138, 95
      %v1172 = vpop.permute.xlu0 %1171
      %1173 = vrot.lane.b32.xlu0 %v1139, 95
      %v1174 = vpop.permute.xlu0 %1173
      %1175 = vrot.lane.b32.xlu0 %v1140, 95
      %v1176 = vpop.permute.xlu0 %1175
      %vm1177 = vcmask 777216
      %v1178 = vsel %vm1177, %v1154, %v1156
      %v1179 = vsel %vm1177, %v1156, %v1158
      %v1180 = vsel %vm1177, %v1160, %v1162
      %v1181 = vsel %vm1177, %v1162, %v1164
      %v1182 = vsel %vm1177, %v1166, %v1168
      %v1183 = vsel %vm1177, %v1168, %v1170
      %v1184 = vsel %vm1177, %v1172, %v1174
      %v1185 = vsel %vm1177, %v1174, %v1176
      %v1198 = vadd.f32 %v1101, %v1154
      %v1199 = vadd.f32 %v1102, %v1178
      %v1200 = vadd.f32 %v1103, %v1179
      %v1201 = vadd.f32 %v1104, %v1160
      %v1202 = vadd.f32 %v1105, %v1180
      %v1203 = vadd.f32 %v1106, %v1181
      %v1204 = vadd.f32 %v1107, %v1166
      %v1205 = vadd.f32 %v1108, %v1182
      %v1206 = vadd.f32 %v1109, %v1183
      %v1207 = vadd.f32 %v1110, %v1172
      %v1208 = vadd.f32 %v1111, %v1184
      %v1209 = vadd.f32 %v1112, %v1185
      %1210 = vrot.lane.b32.xlu0 %v573, 17
      %v1211 = vpop.permute.xlu0 %1210
      %1212 = vrot.lane.b32.xlu0 %v577, 17
      %v1213 = vpop.permute.xlu0 %1212
      %vm1214 = vcmask 138240
      %v1215 = vsel %vm1214, %v1211, %v1213
      %v1219 = vmul.f32 %v387, %v1211
      %v1220 = vmul.f32 %v388, %v1215
      %v1221 = vmul.f32 %v1213, 0.0
      %v1222 = vmul.f32 %v389, %v1211
      %v1223 = vmul.f32 %v390, %v1215
      %v1224 = vmul.f32 %v391, %v1211
      %v1225 = vmul.f32 %v392, %v1215
      %v1226 = vmul.f32 %v393, %v1211
      %v1227 = vmul.f32 %v394, %v1215
      %1228 = vset.pattern.permute.xlu0 8
      %1229 = vperm.xlu0 %1228, %v397
      %v1230 = vpop.permute.xlu0 %1229
      %1232 = vset.pattern.permute.xlu0 8
      %1233 = vperm.xlu0 %1232, %v398
      %v1234 = vpop.permute.xlu0 %1233
      %1236 = vset.pattern.permute.xlu0 8
      %1237 = vperm.xlu0 %1236, %v399
      %v1238 = vpop.permute.xlu0 %1237
      %1240 = vset.pattern.permute.xlu0 8
      %1241 = vperm.xlu0 %1240, %v400
      %v1242 = vpop.permute.xlu0 %1241
      %v1244 = vmul.f32 %v1219, %v1230
      %v1245 = vmul.f32 %v1220, %v1230
      %v1246 = vmul.f32 %v1221, %v1230
      %v1247 = vmul.f32 %v1222, %v1234
      %v1248 = vmul.f32 %v1223, %v1234
      %v1249 = vmul.f32 %v1221, %v1234
      %v1250 = vmul.f32 %v1224, %v1238
      %v1251 = vmul.f32 %v1225, %v1238
      %v1252 = vmul.f32 %v1221, %v1238
      %v1253 = vmul.f32 %v1226, %v1242
      %v1254 = vmul.f32 %v1227, %v1242
      %v1255 = vmul.f32 %v1221, %v1242
      %1268 = vrot.lane.b32.xlu0 %v1244, 94
      %v1269 = vpop.permute.xlu0 %1268
      %1270 = vrot.lane.b32.xlu0 %v1245, 94
      %v1271 = vpop.permute.xlu0 %1270
      %1272 = vrot.lane.b32.xlu0 %v1246, 94
      %v1273 = vpop.permute.xlu0 %1272
      %1274 = vrot.lane.b32.xlu0 %v1247, 94
      %v1275 = vpop.permute.xlu0 %1274
      %1276 = vrot.lane.b32.xlu0 %v1248, 94
      %v1277 = vpop.permute.xlu0 %1276
      %1278 = vrot.lane.b32.xlu0 %v1249, 94
      %v1279 = vpop.permute.xlu0 %1278
      %1280 = vrot.lane.b32.xlu0 %v1250, 94
      %v1281 = vpop.permute.xlu0 %1280
      %1282 = vrot.lane.b32.xlu0 %v1251, 94
      %v1283 = vpop.permute.xlu0 %1282
      %1284 = vrot.lane.b32.xlu0 %v1252, 94
      %v1285 = vpop.permute.xlu0 %1284
      %1286 = vrot.lane.b32.xlu0 %v1253, 94
      %v1287 = vpop.permute.xlu0 %1286
      %1288 = vrot.lane.b32.xlu0 %v1254, 94
      %v1289 = vpop.permute.xlu0 %1288
      %1290 = vrot.lane.b32.xlu0 %v1255, 94
      %v1291 = vpop.permute.xlu0 %1290
      %vm1292 = vcmask 769024
      %v1293 = vsel %vm1292, %v1269, %v1271
      %v1294 = vsel %vm1292, %v1271, %v1273
      %v1295 = vsel %vm1292, %v1275, %v1277
      %v1296 = vsel %vm1292, %v1277, %v1279
      %v1297 = vsel %vm1292, %v1281, %v1283
      %v1298 = vsel %vm1292, %v1283, %v1285
      %v1299 = vsel %vm1292, %v1287, %v1289
      %v1300 = vsel %vm1292, %v1289, %v1291
      %v1313 = vadd.f32 %v1198, %v1269
      %v1314 = vadd.f32 %v1199, %v1293
      %v1315 = vadd.f32 %v1200, %v1294
      %v1316 = vadd.f32 %v1201, %v1275
      %v1317 = vadd.f32 %v1202, %v1295
      %v1318 = vadd.f32 %v1203, %v1296
      %v1319 = vadd.f32 %v1204, %v1281
      %v1320 = vadd.f32 %v1205, %v1297
      %v1321 = vadd.f32 %v1206, %v1298
      %v1322 = vadd.f32 %v1207, %v1287
      %v1323 = vadd.f32 %v1208, %v1299
      %v1324 = vadd.f32 %v1209, %v1300
      %v1325 = vld [vmem:[%s4] sm:$0xff]
      %v1326 = vld [vmem:[%s4 + $0x8] sm:$0xff]
      %v1327 = vld [vmem:[%s4 + $0x10] sm:$0xff]
      %v1328 = vld [vmem:[%s4 + $0x18] sm:$0xff]
      %v1329 = vld [vmem:[%s5] sm:$0xff]
      %v1330 = vld [vmem:[%s5 + $0x8] sm:$0xff]
      %v1331 = vld [vmem:[%s5 + $0x10] sm:$0xff]
      %v1332 = vld [vmem:[%s5 + $0x18] sm:$0xff]
      %1334 = vset.pattern.permute.xlu0 0
      %1335 = vperm.xlu0 %1334, %v1329
      %v1336 = vpop.permute.xlu0 %1335
      %1339 = vset.pattern.permute.xlu0 0
      %1340 = vperm.xlu0 %1339, %v1330
      %v1341 = vpop.permute.xlu0 %1340
      %1344 = vset.pattern.permute.xlu0 0
      %1345 = vperm.xlu0 %1344, %v1331
      %v1346 = vpop.permute.xlu0 %1345
      %1349 = vset.pattern.permute.xlu0 0
      %1350 = vperm.xlu0 %1349, %v1332
      %v1351 = vpop.permute.xlu0 %1350
      %1365 = vrot.lane.b32.xlu0 %v1313, 17
      %v1366 = vpop.permute.xlu0 %1365
      %1367 = vrot.lane.b32.xlu0 %v1314, 17
      %v1368 = vpop.permute.xlu0 %1367
      %1369 = vrot.lane.b32.xlu0 %v1315, 17
      %v1370 = vpop.permute.xlu0 %1369
      %1371 = vrot.lane.b32.xlu0 %v1316, 17
      %v1372 = vpop.permute.xlu0 %1371
      %1373 = vrot.lane.b32.xlu0 %v1317, 17
      %v1374 = vpop.permute.xlu0 %1373
      %1375 = vrot.lane.b32.xlu0 %v1318, 17
      %v1376 = vpop.permute.xlu0 %1375
      %1377 = vrot.lane.b32.xlu0 %v1319, 17
      %v1378 = vpop.permute.xlu0 %1377
      %1379 = vrot.lane.b32.xlu0 %v1320, 17
      %v1380 = vpop.permute.xlu0 %1379
      %1381 = vrot.lane.b32.xlu0 %v1321, 17
      %v1382 = vpop.permute.xlu0 %1381
      %1383 = vrot.lane.b32.xlu0 %v1322, 17
      %v1384 = vpop.permute.xlu0 %1383
      %1385 = vrot.lane.b32.xlu0 %v1323, 17
      %v1386 = vpop.permute.xlu0 %1385
      %1387 = vrot.lane.b32.xlu0 %v1324, 17
      %v1388 = vpop.permute.xlu0 %1387
      %v1389 = vsel %vm1214, %v1366, %v1368
      %v1390 = vsel %vm1214, %v1368, %v1370
      %v1391 = vsel %vm1214, %v1372, %v1374
      %v1392 = vsel %vm1214, %v1374, %v1376
      %v1393 = vsel %vm1214, %v1378, %v1380
      %v1394 = vsel %vm1214, %v1380, %v1382
      %v1395 = vsel %vm1214, %v1384, %v1386
      %v1396 = vsel %vm1214, %v1386, %v1388
      %vm1405 = vcmask 261120
      %v1407 = vsel %vm1405, %v1325, 0
      %v1410 = vsel %vm1405, %v1326, 0
      %v1413 = vsel %vm1405, %v1327, 0
      %v1416 = vsel %vm1405, %v1328, 0
      %1418 = vmatprep.subr.mxu0 %v1390
      %1419 = vmatpush1.msra.mxu0 %v1389
      %1420 = vmatprep.subr.mxu0 %v1392
      %1421 = vmatpush1.msra.mxu0 %v1391
      %1422 = vmatprep.subr.mxu0 %v1394
      %1423 = vmatpush1.msra.mxu0 %v1393
      %1424 = vmatprep.subr.mxu0 %v1396
      %1425 = vmatpush1.msra.mxu0 %v1395
      %1426 = vmatprep.subr.mxu0 0.0
      %1427 = vmatpush1.msra.mxu0 0.0
      %1428 = vmatprep.subr.mxu0 0.0
      %1429 = vmatpush1.msra.mxu0 0.0
      %1430 = vmatprep.subr.mxu0 0.0
      %1431 = vmatpush1.msra.mxu0 0.0
      %1432 = vmatprep.subr.mxu0 0.0
      %1433 = vmatpush1.msra.mxu0 0.0
      %1434 = vmatprep.subr.mxu0 0.0
      %1435 = vmatpush1.msra.mxu0 0.0
      %1436 = vmatprep.subr.mxu0 0.0
      %1437 = vmatpush1.msra.mxu0 0.0
      %1438 = vmatprep.subr.mxu0 0.0
      %1439 = vmatpush1.msra.mxu0 0.0
      %1440 = vmatprep.subr.mxu0 0.0
      %1441 = vmatpush1.msra.mxu0 0.0
      %1442 = vmatprep.subr.mxu0 0.0
      %1443 = vmatpush1.msra.mxu0 0.0
      %1444 = vmatprep.subr.mxu0 0.0
      %1445 = vmatpush1.msra.mxu0 0.0
      %1446 = vmatprep.subr.mxu0 0.0
      %1447 = vmatpush1.msra.mxu0 0.0
      %1448 = vmatprep.subr.mxu0 0.0
      %1449 = vmatpush1.msra.mxu0 0.0
      %1450 = vmatprep.subr.mxu0 0.0
      %1451 = vmatpush1.msra.mxu0 0.0
      %1452 = vmatprep.subr.mxu0 0.0
      %1453 = vmatpush1.msra.mxu0 0.0
      %1454 = vmatprep.subr.mxu0 0.0
      %1455 = vmatpush1.msra.mxu0 0.0
      %1456 = vmatprep.subr.mxu0 0.0
      %1457 = vmatpush1.msra.mxu0 0.0
      %1458 = vmatprep.subr.mxu0 0.0
      %1459 = vmatpush1.msra.mxu0 0.0
      %1460 = vmatprep.subr.mxu0 0.0
      %1461 = vmatpush1.msra.mxu0 0.0
      %1462 = vmatprep.subr.mxu0 0.0
      %1463 = vmatpush1.msra.mxu0 0.0
      %1464 = vmatprep.subr.mxu0 0.0
      %1465 = vmatpush1.msra.mxu0 0.0
      %1466 = vmatprep.subr.mxu0 0.0
      %1467 = vmatpush1.msra.mxu0 0.0
      %1468 = vmatprep.subr.mxu0 0.0
      %1469 = vmatpush1.msra.mxu0 0.0
      %1470 = vmatprep.subr.mxu0 0.0
      %1471 = vmatpush1.msra.mxu0 0.0
      %1472 = vmatprep.subr.mxu0 0.0
      %1473 = vmatpush1.msra.mxu0 0.0
      %1474 = vmatprep.subr.mxu0 0.0
      %1475 = vmatpush1.msra.mxu0 0.0
      %1476 = vmatprep.subr.mxu0 0.0
      %1477 = vmatpush1.msra.mxu0 0.0
      %1478 = vmatprep.subr.mxu0 0.0
      %1479 = vmatpush1.msra.mxu0 0.0
      %1480 = vmatprep.subr.mxu0 0.0
      %1481 = vmatpush1.msra.mxu0 0.0
      %1482 = vmatprep.mubr.f32.mxu0 0.0
      %1483 = vmatmul.mubr.f32.gmra.mrb[0].mxu0 %v1407
      %v1484 = vpop.f32.mrb[0].mxu0
      %v1485 = vadd.f32 %v1336, %v1484
      %v1486 = vpop.f32.mrb[0].mxu0
      %v1487 = vadd.f32 %v1336, %v1486
      %1488 = vmatprep.mubr.f32.mxu0 0.0
      %1489 = vmatmul.mubr.f32.gmra.mrb[0].mxu0 %v1410
      %v1490 = vpop.f32.mrb[0].mxu0
      %v1491 = vadd.f32 %v1341, %v1490
      %v1492 = vpop.f32.mrb[0].mxu0
      %v1493 = vadd.f32 %v1341, %v1492
      %1494 = vmatprep.mubr.f32.mxu0 0.0
      %1495 = vmatmul.mubr.f32.gmra.mrb[0].mxu0 %v1413
      %v1496 = vpop.f32.mrb[0].mxu0
      %v1497 = vadd.f32 %v1346, %v1496
      %v1498 = vpop.f32.mrb[0].mxu0
      %v1499 = vadd.f32 %v1346, %v1498
      %1500 = vmatprep.mubr.f32.mxu0 0.0
      %1501 = vmatmul.mubr.f32.gmra.mrb[0].mxu0 %v1416
      %v1502 = vpop.f32.mrb[0].mxu0
      %v1503 = vadd.f32 %v1351, %v1502
      %v1504 = vpop.f32.mrb[0].mxu0
      %v1505 = vadd.f32 %v1351, %v1504
      %1506 = vdwg.mxu0
      %v1507 = vmul.f32 %v1485, 0.2
      %v1508 = vmul.f32 %v1487, 0.2
      %v1509 = vmul.f32 %v1491, 0.2
      %v1510 = vmul.f32 %v1493, 0.2
      %v1511 = vmul.f32 %v1497, 0.2
      %v1512 = vmul.f32 %v1499, 0.2
      %v1513 = vmul.f32 %v1503, 0.2
      %v1514 = vmul.f32 %v1505, 0.2
      %v1515 = vmax.f32 %v1485, %v1507
      %v1516 = vmax.f32 %v1487, %v1508
      %v1517 = vmax.f32 %v1491, %v1509
      %v1518 = vmax.f32 %v1493, %v1510
      %v1519 = vmax.f32 %v1497, %v1511
      %v1520 = vmax.f32 %v1499, %v1512
      %v1521 = vmax.f32 %v1503, %v1513
      %v1522 = vmax.f32 %v1505, %v1514
      %v1523 = vld [vmem:[%s6] sm:$0xff]
      %v1524 = vld [vmem:[%s6 + $0x8] sm:$0xff]
      %v1525 = vld [vmem:[%s6 + $0x10] sm:$0xff]
      %v1526 = vld [vmem:[%s6 + $0x18] sm:$0xff]
      %v1527 = vmul.f32 %v1515, %v415
      %v1528 = vmul.f32 %v1516, %v413
      %v1529 = vmul.f32 %v1517, %v415
      %v1530 = vmul.f32 %v1518, %v413
      %v1531 = vmul.f32 %v1519, %v415
      %v1532 = vmul.f32 %v1520, %v413
      %v1533 = vmul.f32 %v1521, %v415
      %v1534 = vmul.f32 %v1522, %v413
      %1536 = vset.pattern.permute.xlu0 0
      %1537 = vperm.xlu0 %1536, %v1523
      %v1538 = vpop.permute.xlu0 %1537
      %1541 = vset.pattern.permute.xlu0 0
      %1542 = vperm.xlu0 %1541, %v1524
      %v1543 = vpop.permute.xlu0 %1542
      %1546 = vset.pattern.permute.xlu0 0
      %1547 = vperm.xlu0 %1546, %v1525
      %v1548 = vpop.permute.xlu0 %1547
      %1551 = vset.pattern.permute.xlu0 0
      %1552 = vperm.xlu0 %1551, %v1526
      %v1553 = vpop.permute.xlu0 %1552
      %v1555 = vmul.f32 %v419, %v1538
      %v1556 = vmul.f32 %v1527, %v1538
      %v1557 = vmul.f32 %v1528, %v1538
      %v1558 = vmul.f32 %v419, %v1543
      %v1559 = vmul.f32 %v1529, %v1543
      %v1560 = vmul.f32 %v1530, %v1543
      %v1561 = vmul.f32 %v419, %v1548
      %v1562 = vmul.f32 %v1531, %v1548
      %v1563 = vmul.f32 %v1532, %v1548
      %v1564 = vmul.f32 %v419, %v1553
      %v1565 = vmul.f32 %v1533, %v1553
      %v1566 = vmul.f32 %v1534, %v1553
      %v1567 = vadd.f32 %v1555, 0.0
      %v1568 = vadd.f32 %v1556, 0.0
      %v1569 = vadd.f32 %v1557, 0.0
      %v1570 = vadd.f32 %v1558, 0.0
      %v1571 = vadd.f32 %v1559, 0.0
      %v1572 = vadd.f32 %v1560, 0.0
      %v1573 = vadd.f32 %v1561, 0.0
      %v1574 = vadd.f32 %v1562, 0.0
      %v1575 = vadd.f32 %v1563, 0.0
      %v1576 = vadd.f32 %v1564, 0.0
      %v1577 = vadd.f32 %v1565, 0.0
      %v1578 = vadd.f32 %v1566, 0.0
      %1579 = vset.pattern.permute.xlu0 1
      %1580 = vperm.xlu0 %1579, %v1523
      %v1581 = vpop.permute.xlu0 %1580
      %1583 = vset.pattern.permute.xlu0 1
      %1584 = vperm.xlu0 %1583, %v1524
      %v1585 = vpop.permute.xlu0 %1584
      %1587 = vset.pattern.permute.xlu0 1
      %1588 = vperm.xlu0 %1587, %v1525
      %v1589 = vpop.permute.xlu0 %1588
      %1591 = vset.pattern.permute.xlu0 1
      %1592 = vperm.xlu0 %1591, %v1526
      %v1593 = vpop.permute.xlu0 %1592
      %v1595 = vmul.f32 %v1581, 0.0
      %v1596 = vmul.f32 %v1515, %v1581
      %v1597 = vmul.f32 %v1516, %v1581
      %v1598 = vmul.f32 %v1585, 0.0
      %v1599 = vmul.f32 %v1517, %v1585
      %v1600 = vmul.f32 %v1518, %v1585
      %v1601 = vmul.f32 %v1589, 0.0
      %v1602 = vmul.f32 %v1519, %v1589
      %v1603 = vmul.f32 %v1520, %v1589
      %v1604 = vmul.f32 %v1593, 0.0
      %v1605 = vmul.f32 %v1521, %v1593
      %v1606 = vmul.f32 %v1522, %v1593
      %1619 = vrot.lane.b32.xlu0 %v1595, 127
      %v1620 = vpop.permute.xlu0 %1619
      %1621 = vrot.lane.b32.xlu0 %v1596, 127
      %v1622 = vpop.permute.xlu0 %1621
      %1623 = vrot.lane.b32.xlu0 %v1597, 127
      %v1624 = vpop.permute.xlu0 %1623
      %1625 = vrot.lane.b32.xlu0 %v1598, 127
      %v1626 = vpop.permute.xlu0 %1625
      %1627 = vrot.lane.b32.xlu0 %v1599, 127
      %v1628 = vpop.permute.xlu0 %1627
      %1629 = vrot.lane.b32.xlu0 %v1600, 127
      %v1630 = vpop.permute.xlu0 %1629
      %1631 = vrot.lane.b32.xlu0 %v1601, 127
      %v1632 = vpop.permute.xlu0 %1631
      %1633 = vrot.lane.b32.xlu0 %v1602, 127
      %v1634 = vpop.permute.xlu0 %1633
      %1635 = vrot.lane.b32.xlu0 %v1603, 127
      %v1636 = vpop.permute.xlu0 %1635
      %1637 = vrot.lane.b32.xlu0 %v1604, 127
      %v1638 = vpop.permute.xlu0 %1637
      %1639 = vrot.lane.b32.xlu0 %v1605, 127
      %v1640 = vpop.permute.xlu0 %1639
      %1641 = vrot.lane.b32.xlu0 %v1606, 127
      %v1642 = vpop.permute.xlu0 %1641
      %v1643 = vsel %vm536, %v1620, %v1622
      %v1644 = vsel %vm536, %v1622, %v1624
      %v1645 = vsel %vm536, %v1626, %v1628
      %v1646 = vsel %vm536, %v1628, %v1630
      %v1647 = vsel %vm536, %v1632, %v1634
      %v1648 = vsel %vm536, %v1634, %v1636
      %v1649 = vsel %vm536, %v1638, %v1640
      %v1650 = vsel %vm536, %v1640, %v1642
      %v1663 = vadd.f32 %v1567, %v1643
      %v1664 = vadd.f32 %v1568, %v1644
      %v1665 = vadd.f32 %v1569, %v1624
      %v1666 = vadd.f32 %v1570, %v1645
      %v1667 = vadd.f32 %v1571, %v1646
      %v1668 = vadd.f32 %v1572, %v1630
      %v1669 = vadd.f32 %v1573, %v1647
      %v1670 = vadd.f32 %v1574, %v1648
      %v1671 = vadd.f32 %v1575, %v1636
      %v1672 = vadd.f32 %v1576, %v1649
      %v1673 = vadd.f32 %v1577, %v1650
      %v1674 = vadd.f32 %v1578, %v1642
      %v1675 = vmul.f32 %v1515, %v583
      %v1676 = vmul.f32 %v1516, %v581
      %v1677 = vmul.f32 %v1517, %v583
      %v1678 = vmul.f32 %v1518, %v581
      %v1679 = vmul.f32 %v1519, %v583
      %v1680 = vmul.f32 %v1520, %v581
      %v1681 = vmul.f32 %v1521, %v583
      %v1682 = vmul.f32 %v1522, %v581
      %1683 = vset.pattern.permute.xlu0 2
      %1684 = vperm.xlu0 %1683, %v1523
      %v1685 = vpop.permute.xlu0 %1684
      %1687 = vset.pattern.permute.xlu0 2
      %1688 = vperm.xlu0 %1687, %v1524
      %v1689 = vpop.permute.xlu0 %1688
      %1691 = vset.pattern.permute.xlu0 2
      %1692 = vperm.xlu0 %1691, %v1525
      %v1693 = vpop.permute.xlu0 %1692
      %1695 = vset.pattern.permute.xlu0 2
      %1696 = vperm.xlu0 %1695, %v1526
      %v1697 = vpop.permute.xlu0 %1696
      %v1699 = vmul.f32 %v587, %v1685
      %v1700 = vmul.f32 %v1675, %v1685
      %v1701 = vmul.f32 %v1676, %v1685
      %v1702 = vmul.f32 %v587, %v1689
      %v1703 = vmul.f32 %v1677, %v1689
      %v1704 = vmul.f32 %v1678, %v1689
      %v1705 = vmul.f32 %v587, %v1693
      %v1706 = vmul.f32 %v1679, %v1693
      %v1707 = vmul.f32 %v1680, %v1693
      %v1708 = vmul.f32 %v587, %v1697
      %v1709 = vmul.f32 %v1681, %v1697
      %v1710 = vmul.f32 %v1682, %v1697
      %1723 = vrot.lane.b32.xlu0 %v1699, 126
      %v1724 = vpop.permute.xlu0 %1723
      %1725 = vrot.lane.b32.xlu0 %v1700, 126
      %v1726 = vpop.permute.xlu0 %1725
      %1727 = vrot.lane.b32.xlu0 %v1701, 126
      %v1728 = vpop.permute.xlu0 %1727
      %1729 = vrot.lane.b32.xlu0 %v1702, 126
      %v1730 = vpop.permute.xlu0 %1729
      %1731 = vrot.lane.b32.xlu0 %v1703, 126
      %v1732 = vpop.permute.xlu0 %1731
      %1733 = vrot.lane.b32.xlu0 %v1704, 126
      %v1734 = vpop.permute.xlu0 %1733
      %1735 = vrot.lane.b32.xlu0 %v1705, 126
      %v1736 = vpop.permute.xlu0 %1735
      %1737 = vrot.lane.b32.xlu0 %v1706, 126
      %v1738 = vpop.permute.xlu0 %1737
      %1739 = vrot.lane.b32.xlu0 %v1707, 126
      %v1740 = vpop.permute.xlu0 %1739
      %1741 = vrot.lane.b32.xlu0 %v1708, 126
      %v1742 = vpop.permute.xlu0 %1741
      %1743 = vrot.lane.b32.xlu0 %v1709, 126
      %v1744 = vpop.permute.xlu0 %1743
      %1745 = vrot.lane.b32.xlu0 %v1710, 126
      %v1746 = vpop.permute.xlu0 %1745
      %v1747 = vsel %vm660, %v1724, %v1726
      %v1748 = vsel %vm660, %v1726, %v1728
      %v1749 = vsel %vm660, %v1730, %v1732
      %v1750 = vsel %vm660, %v1732, %v1734
      %v1751 = vsel %vm660, %v1736, %v1738
      %v1752 = vsel %vm660, %v1738, %v1740
      %v1753 = vsel %vm660, %v1742, %v1744
      %v1754 = vsel %vm660, %v1744, %v1746
      %v1767 = vadd.f32 %v1663, %v1747
      %v1768 = vadd.f32 %v1664, %v1748
      %v1769 = vadd.f32 %v1665, %v1728
      %v1770 = vadd.f32 %v1666, %v1749
      %v1771 = vadd.f32 %v1667, %v1750
      %v1772 = vadd.f32 %v1668, %v1734
      %v1773 = vadd.f32 %v1669, %v1751
      %v1774 = vadd.f32 %v1670, %v1752
      %v1775 = vadd.f32 %v1671, %v1740
      %v1776 = vadd.f32 %v1672, %v1753
      %v1777 = vadd.f32 %v1673, %v1754
      %v1778 = vadd.f32 %v1674, %v1746
      %v1779 = vmul.f32 %v1515, %v697
      %v1780 = vmul.f32 %v1516, %v696
      %v1781 = vmul.f32 %v1517, %v697
      %v1782 = vmul.f32 %v1518, %v696
      %v1783 = vmul.f32 %v1519, %v697
      %v1784 = vmul.f32 %v1520, %v696
      %v1785 = vmul.f32 %v1521, %v697
      %v1786 = vmul.f32 %v1522, %v696
      %1787 = vset.pattern.permute.xlu0 3
      %1788 = vperm.xlu0 %1787, %v1523
      %v1789 = vpop.permute.xlu0 %1788
      %1791 = vset.pattern.permute.xlu0 3
      %1792 = vperm.xlu0 %1791, %v1524
      %v1793 = vpop.permute.xlu0 %1792
      %1795 = vset.pattern.permute.xlu0 3
      %1796 = vperm.xlu0 %1795, %v1525
      %v1797 = vpop.permute.xlu0 %1796
      %1799 = vset.pattern.permute.xlu0 3
      %1800 = vperm.xlu0 %1799, %v1526
      %v1801 = vpop.permute.xlu0 %1800
      %v1803 = vmul.f32 %v701, %v1789
      %v1804 = vmul.f32 %v1779, %v1789
      %v1805 = vmul.f32 %v1780, %v1789
      %v1806 = vmul.f32 %v701, %v1793
      %v1807 = vmul.f32 %v1781, %v1793
      %v1808 = vmul.f32 %v1782, %v1793
      %v1809 = vmul.f32 %v701, %v1797
      %v1810 = vmul.f32 %v1783, %v1797
      %v1811 = vmul.f32 %v1784, %v1797
      %v1812 = vmul.f32 %v701, %v1801
      %v1813 = vmul.f32 %v1785, %v1801
      %v1814 = vmul.f32 %v1786, %v1801
      %1827 = vrot.lane.b32.xlu0 %v1803, 112
      %v1828 = vpop.permute.xlu0 %1827
      %1829 = vrot.lane.b32.xlu0 %v1804, 112
      %v1830 = vpop.permute.xlu0 %1829
      %1831 = vrot.lane.b32.xlu0 %v1805, 112
      %v1832 = vpop.permute.xlu0 %1831
      %1833 = vrot.lane.b32.xlu0 %v1806, 112
      %v1834 = vpop.permute.xlu0 %1833
      %1835 = vrot.lane.b32.xlu0 %v1807, 112
      %v1836 = vpop.permute.xlu0 %1835
      %1837 = vrot.lane.b32.xlu0 %v1808, 112
      %v1838 = vpop.permute.xlu0 %1837
      %1839 = vrot.lane.b32.xlu0 %v1809, 112
      %v1840 = vpop.permute.xlu0 %1839
      %1841 = vrot.lane.b32.xlu0 %v1810, 112
      %v1842 = vpop.permute.xlu0 %1841
      %1843 = vrot.lane.b32.xlu0 %v1811, 112
      %v1844 = vpop.permute.xlu0 %1843
      %1845 = vrot.lane.b32.xlu0 %v1812, 112
      %v1846 = vpop.permute.xlu0 %1845
      %1847 = vrot.lane.b32.xlu0 %v1813, 112
      %v1848 = vpop.permute.xlu0 %1847
      %1849 = vrot.lane.b32.xlu0 %v1814, 112
      %v1850 = vpop.permute.xlu0 %1849
      %v1851 = vsel %vm774, %v1828, %v1830
      %v1852 = vsel %vm774, %v1830, %v1832
      %v1853 = vsel %vm774, %v1834, %v1836
      %v1854 = vsel %vm774, %v1836, %v1838
      %v1855 = vsel %vm774, %v1840, %v1842
      %v1856 = vsel %vm774, %v1842, %v1844
      %v1857 = vsel %vm774, %v1846, %v1848
      %v1858 = vsel %vm774, %v1848, %v1850
      %v1871 = vadd.f32 %v1767, %v1851
      %v1872 = vadd.f32 %v1768, %v1852
      %v1873 = vadd.f32 %v1769, %v1832
      %v1874 = vadd.f32 %v1770, %v1853
      %v1875 = vadd.f32 %v1771, %v1854
      %v1876 = vadd.f32 %v1772, %v1838
      %v1877 = vadd.f32 %v1773, %v1855
      %v1878 = vadd.f32 %v1774, %v1856
      %v1879 = vadd.f32 %v1775, %v1844
      %v1880 = vadd.f32 %v1776, %v1857
      %v1881 = vadd.f32 %v1777, %v1858
      %v1882 = vadd.f32 %v1778, %v1850
      %1883 = vset.pattern.permute.xlu0 4
      %1884 = vperm.xlu0 %1883, %v1523
      %v1885 = vpop.permute.xlu0 %1884
      %1887 = vset.pattern.permute.xlu0 4
      %1888 = vperm.xlu0 %1887, %v1524
      %v1889 = vpop.permute.xlu0 %1888
      %1891 = vset.pattern.permute.xlu0 4
      %1892 = vperm.xlu0 %1891, %v1525
      %v1893 = vpop.permute.xlu0 %1892
      %1895 = vset.pattern.permute.xlu0 4
      %1896 = vperm.xlu0 %1895, %v1526
      %v1897 = vpop.permute.xlu0 %1896
      %v1899 = vmul.f32 %v1515, %v1885
      %v1900 = vmul.f32 %v1516, %v1885
      %v1901 = vmul.f32 %v1517, %v1889
      %v1902 = vmul.f32 %v1518, %v1889
      %v1903 = vmul.f32 %v1519, %v1893
      %v1904 = vmul.f32 %v1520, %v1893
      %v1905 = vmul.f32 %v1521, %v1897
      %v1906 = vmul.f32 %v1522, %v1897
      %1915 = vrot.lane.b32.xlu0 %v1899, 111
      %v1916 = vpop.permute.xlu0 %1915
      %1917 = vrot.lane.b32.xlu0 %v1900, 111
      %v1918 = vpop.permute.xlu0 %1917
      %1919 = vrot.lane.b32.xlu0 %v1901, 111
      %v1920 = vpop.permute.xlu0 %1919
      %1921 = vrot.lane.b32.xlu0 %v1902, 111
      %v1922 = vpop.permute.xlu0 %1921
      %1923 = vrot.lane.b32.xlu0 %v1903, 111
      %v1924 = vpop.permute.xlu0 %1923
      %1925 = vrot.lane.b32.xlu0 %v1904, 111
      %v1926 = vpop.permute.xlu0 %1925
      %1927 = vrot.lane.b32.xlu0 %v1905, 111
      %v1928 = vpop.permute.xlu0 %1927
      %1929 = vrot.lane.b32.xlu0 %v1906, 111
      %v1930 = vpop.permute.xlu0 %1929
      %v1931 = vsel %vm414, %v1916, %v1918
      %v1932 = vsel %vm414, %v1920, %v1922
      %v1933 = vsel %vm414, %v1924, %v1926
      %v1934 = vsel %vm414, %v1928, %v1930
      %v1947 = vadd.f32 %v1871, %v1916
      %v1948 = vadd.f32 %v1872, %v1931
      %v1949 = vadd.f32 %v1873, %v1918
      %v1950 = vadd.f32 %v1874, %v1920
      %v1951 = vadd.f32 %v1875, %v1932
      %v1952 = vadd.f32 %v1876, %v1922
      %v1953 = vadd.f32 %v1877, %v1924
      %v1954 = vadd.f32 %v1878, %v1933
      %v1955 = vadd.f32 %v1879, %v1926
      %v1956 = vadd.f32 %v1880, %v1928
      %v1957 = vadd.f32 %v1881, %v1934
      %v1958 = vadd.f32 %v1882, %v1930
      %v1959 = vmul.f32 %v1515, %v884
      %v1960 = vmul.f32 %v1516, %v888
      %v1961 = vmul.f32 %v1517, %v884
      %v1962 = vmul.f32 %v1518, %v888
      %v1963 = vmul.f32 %v1519, %v884
      %v1964 = vmul.f32 %v1520, %v888
      %v1965 = vmul.f32 %v1521, %v884
      %v1966 = vmul.f32 %v1522, %v888
      %1967 = vset.pattern.permute.xlu0 5
      %1968 = vperm.xlu0 %1967, %v1523
      %v1969 = vpop.permute.xlu0 %1968
      %1971 = vset.pattern.permute.xlu0 5
      %1972 = vperm.xlu0 %1971, %v1524
      %v1973 = vpop.permute.xlu0 %1972
      %1975 = vset.pattern.permute.xlu0 5
      %1976 = vperm.xlu0 %1975, %v1525
      %v1977 = vpop.permute.xlu0 %1976
      %1979 = vset.pattern.permute.xlu0 5
      %1980 = vperm.xlu0 %1979, %v1526
      %v1981 = vpop.permute.xlu0 %1980
      %v1983 = vmul.f32 %v1959, %v1969
      %v1984 = vmul.f32 %v1960, %v1969
      %v1985 = vmul.f32 %v894, %v1969
      %v1986 = vmul.f32 %v1961, %v1973
      %v1987 = vmul.f32 %v1962, %v1973
      %v1988 = vmul.f32 %v894, %v1973
      %v1989 = vmul.f32 %v1963, %v1977
      %v1990 = vmul.f32 %v1964, %v1977
      %v1991 = vmul.f32 %v894, %v1977
      %v1992 = vmul.f32 %v1965, %v1981
      %v1993 = vmul.f32 %v1966, %v1981
      %v1994 = vmul.f32 %v894, %v1981
      %2007 = vrot.lane.b32.xlu0 %v1983, 110
      %v2008 = vpop.permute.xlu0 %2007
      %2009 = vrot.lane.b32.xlu0 %v1984, 110
      %v2010 = vpop.permute.xlu0 %2009
      %2011 = vrot.lane.b32.xlu0 %v1985, 110
      %v2012 = vpop.permute.xlu0 %2011
      %2013 = vrot.lane.b32.xlu0 %v1986, 110
      %v2014 = vpop.permute.xlu0 %2013
      %2015 = vrot.lane.b32.xlu0 %v1987, 110
      %v2016 = vpop.permute.xlu0 %2015
      %2017 = vrot.lane.b32.xlu0 %v1988, 110
      %v2018 = vpop.permute.xlu0 %2017
      %2019 = vrot.lane.b32.xlu0 %v1989, 110
      %v2020 = vpop.permute.xlu0 %2019
      %2021 = vrot.lane.b32.xlu0 %v1990, 110
      %v2022 = vpop.permute.xlu0 %2021
      %2023 = vrot.lane.b32.xlu0 %v1991, 110
      %v2024 = vpop.permute.xlu0 %2023
      %2025 = vrot.lane.b32.xlu0 %v1992, 110
      %v2026 = vpop.permute.xlu0 %2025
      %2027 = vrot.lane.b32.xlu0 %v1993, 110
      %v2028 = vpop.permute.xlu0 %2027
      %2029 = vrot.lane.b32.xlu0 %v1994, 110
      %v2030 = vpop.permute.xlu0 %2029
      %v2031 = vsel %vm965, %v2008, %v2010
      %v2032 = vsel %vm965, %v2010, %v2012
      %v2033 = vsel %vm965, %v2014, %v2016
      %v2034 = vsel %vm965, %v2016, %v2018
      %v2035 = vsel %vm965, %v2020, %v2022
      %v2036 = vsel %vm965, %v2022, %v2024
      %v2037 = vsel %vm965, %v2026, %v2028
      %v2038 = vsel %vm965, %v2028, %v2030
      %v2051 = vadd.f32 %v1947, %v2008
      %v2052 = vadd.f32 %v1948, %v2031
      %v2053 = vadd.f32 %v1949, %v2032
      %v2054 = vadd.f32 %v1950, %v2014
      %v2055 = vadd.f32 %v1951, %v2033
      %v2056 = vadd.f32 %v1952, %v2034
      %v2057 = vadd.f32 %v1953, %v2020
      %v2058 = vadd.f32 %v1954, %v2035
      %v2059 = vadd.f32 %v1955, %v2036
      %v2060 = vadd.f32 %v1956, %v2026
      %v2061 = vadd.f32 %v1957, %v2037
      %v2062 = vadd.f32 %v1958, %v2038
      %v2063 = vmul.f32 %v1515, %v999
      %v2064 = vmul.f32 %v1516, %v1003
      %v2065 = vmul.f32 %v1517, %v999
      %v2066 = vmul.f32 %v1518, %v1003
      %v2067 = vmul.f32 %v1519, %v999
      %v2068 = vmul.f32 %v1520, %v1003
      %v2069 = vmul.f32 %v1521, %v999
      %v2070 = vmul.f32 %v1522, %v1003
      %2071 = vset.pattern.permute.xlu0 6
      %2072 = vperm.xlu0 %2071, %v1523
      %v2073 = vpop.permute.xlu0 %2072
      %2075 = vset.pattern.permute.xlu0 6
      %2076 = vperm.xlu0 %2075, %v1524
      %v2077 = vpop.permute.xlu0 %2076
      %2079 = vset.pattern.permute.xlu0 6
      %2080 = vperm.xlu0 %2079, %v1525
      %v2081 = vpop.permute.xlu0 %2080
      %2083 = vset.pattern.permute.xlu0 6
      %2084 = vperm.xlu0 %2083, %v1526
      %v2085 = vpop.permute.xlu0 %2084
      %v2087 = vmul.f32 %v2063, %v2073
      %v2088 = vmul.f32 %v2064, %v2073
      %v2089 = vmul.f32 %v1009, %v2073
      %v2090 = vmul.f32 %v2065, %v2077
      %v2091 = vmul.f32 %v2066, %v2077
      %v2092 = vmul.f32 %v1009, %v2077
      %v2093 = vmul.f32 %v2067, %v2081
      %v2094 = vmul.f32 %v2068, %v2081
      %v2095 = vmul.f32 %v1009, %v2081
      %v2096 = vmul.f32 %v2069, %v2085
      %v2097 = vmul.f32 %v2070, %v2085
      %v2098 = vmul.f32 %v1009, %v2085
      %2111 = vrot.lane.b32.xlu0 %v2087, 96
      %v2112 = vpop.permute.xlu0 %2111
      %2113 = vrot.lane.b32.xlu0 %v2088, 96
      %v2114 = vpop.permute.xlu0 %2113
      %2115 = vrot.lane.b32.xlu0 %v2089, 96
      %v2116 = vpop.permute.xlu0 %2115
      %2117 = vrot.lane.b32.xlu0 %v2090, 96
      %v2118 = vpop.permute.xlu0 %2117
      %2119 = vrot.lane.b32.xlu0 %v2091, 96
      %v2120 = vpop.permute.xlu0 %2119
      %2121 = vrot.lane.b32.xlu0 %v2092, 96
      %v2122 = vpop.permute.xlu0 %2121
      %2123 = vrot.lane.b32.xlu0 %v2093, 96
      %v2124 = vpop.permute.xlu0 %2123
      %2125 = vrot.lane.b32.xlu0 %v2094, 96
      %v2126 = vpop.permute.xlu0 %2125
      %2127 = vrot.lane.b32.xlu0 %v2095, 96
      %v2128 = vpop.permute.xlu0 %2127
      %2129 = vrot.lane.b32.xlu0 %v2096, 96
      %v2130 = vpop.permute.xlu0 %2129
      %2131 = vrot.lane.b32.xlu0 %v2097, 96
      %v2132 = vpop.permute.xlu0 %2131
      %2133 = vrot.lane.b32.xlu0 %v2098, 96
      %v2134 = vpop.permute.xlu0 %2133
      %v2135 = vsel %vm1080, %v2112, %v2114
      %v2136 = vsel %vm1080, %v2114, %v2116
      %v2137 = vsel %vm1080, %v2118, %v2120
      %v2138 = vsel %vm1080, %v2120, %v2122
      %v2139 = vsel %vm1080, %v2124, %v2126
      %v2140 = vsel %vm1080, %v2126, %v2128
      %v2141 = vsel %vm1080, %v2130, %v2132
      %v2142 = vsel %vm1080, %v2132, %v2134
      %v2155 = vadd.f32 %v2051, %v2112
      %v2156 = vadd.f32 %v2052, %v2135
      %v2157 = vadd.f32 %v2053, %v2136
      %v2158 = vadd.f32 %v2054, %v2118
      %v2159 = vadd.f32 %v2055, %v2137
      %v2160 = vadd.f32 %v2056, %v2138
      %v2161 = vadd.f32 %v2057, %v2124
      %v2162 = vadd.f32 %v2058, %v2139
      %v2163 = vadd.f32 %v2059, %v2140
      %v2164 = vadd.f32 %v2060, %v2130
      %v2165 = vadd.f32 %v2061, %v2141
      %v2166 = vadd.f32 %v2062, %v2142
      %2167 = vset.pattern.permute.xlu0 7
      %2168 = vperm.xlu0 %2167, %v1523
      %v2169 = vpop.permute.xlu0 %2168
      %2171 = vset.pattern.permute.xlu0 7
      %2172 = vperm.xlu0 %2171, %v1524
      %v2173 = vpop.permute.xlu0 %2172
      %2175 = vset.pattern.permute.xlu0 7
      %2176 = vperm.xlu0 %2175, %v1525
      %v2177 = vpop.permute.xlu0 %2176
      %2179 = vset.pattern.permute.xlu0 7
      %2180 = vperm.xlu0 %2179, %v1526
      %v2181 = vpop.permute.xlu0 %2180
      %v2183 = vmul.f32 %v1515, %v2169
      %v2184 = vmul.f32 %v1516, %v2169
      %v2185 = vmul.f32 %v2169, 0.0
      %v2186 = vmul.f32 %v1517, %v2173
      %v2187 = vmul.f32 %v1518, %v2173
      %v2188 = vmul.f32 %v2173, 0.0
      %v2189 = vmul.f32 %v1519, %v2177
      %v2190 = vmul.f32 %v1520, %v2177
      %v2191 = vmul.f32 %v2177, 0.0
      %v2192 = vmul.f32 %v1521, %v2181
      %v2193 = vmul.f32 %v1522, %v2181
      %v2194 = vmul.f32 %v2181, 0.0
      %2207 = vrot.lane.b32.xlu0 %v2183, 95
      %v2208 = vpop.permute.xlu0 %2207
      %2209 = vrot.lane.b32.xlu0 %v2184, 95
      %v2210 = vpop.permute.xlu0 %2209
      %2211 = vrot.lane.b32.xlu0 %v2185, 95
      %v2212 = vpop.permute.xlu0 %2211
      %2213 = vrot.lane.b32.xlu0 %v2186, 95
      %v2214 = vpop.permute.xlu0 %2213
      %2215 = vrot.lane.b32.xlu0 %v2187, 95
      %v2216 = vpop.permute.xlu0 %2215
      %2217 = vrot.lane.b32.xlu0 %v2188, 95
      %v2218 = vpop.permute.xlu0 %2217
      %2219 = vrot.lane.b32.xlu0 %v2189, 95
      %v2220 = vpop.permute.xlu0 %2219
      %2221 = vrot.lane.b32.xlu0 %v2190, 95
      %v2222 = vpop.permute.xlu0 %2221
      %2223 = vrot.lane.b32.xlu0 %v2191, 95
      %v2224 = vpop.permute.xlu0 %2223
      %2225 = vrot.lane.b32.xlu0 %v2192, 95
      %v2226 = vpop.permute.xlu0 %2225
      %2227 = vrot.lane.b32.xlu0 %v2193, 95
      %v2228 = vpop.permute.xlu0 %2227
      %2229 = vrot.lane.b32.xlu0 %v2194, 95
      %v2230 = vpop.permute.xlu0 %2229
      %v2231 = vsel %vm1177, %v2208, %v2210
      %v2232 = vsel %vm1177, %v2210, %v2212
      %v2233 = vsel %vm1177, %v2214, %v2216
      %v2234 = vsel %vm1177, %v2216, %v2218
      %v2235 = vsel %vm1177, %v2220, %v2222
      %v2236 = vsel %vm1177, %v2222, %v2224
      %v2237 = vsel %vm1177, %v2226, %v2228
      %v2238 = vsel %vm1177, %v2228, %v2230
      %v2251 = vadd.f32 %v2155, %v2208
      %v2252 = vadd.f32 %v2156, %v2231
      %v2253 = vadd.f32 %v2157, %v2232
      %v2254 = vadd.f32 %v2158, %v2214
      %v2255 = vadd.f32 %v2159, %v2233
      %v2256 = vadd.f32 %v2160, %v2234
      %v2257 = vadd.f32 %v2161, %v2220
      %v2258 = vadd.f32 %v2162, %v2235
      %v2259 = vadd.f32 %v2163, %v2236
      %v2260 = vadd.f32 %v2164, %v2226
      %v2261 = vadd.f32 %v2165, %v2237
      %v2262 = vadd.f32 %v2166, %v2238
      %v2263 = vmul.f32 %v1515, %v1211
      %v2264 = vmul.f32 %v1516, %v1215
      %v2265 = vmul.f32 %v1517, %v1211
      %v2266 = vmul.f32 %v1518, %v1215
      %v2267 = vmul.f32 %v1519, %v1211
      %v2268 = vmul.f32 %v1520, %v1215
      %v2269 = vmul.f32 %v1521, %v1211
      %v2270 = vmul.f32 %v1522, %v1215
      %2271 = vset.pattern.permute.xlu0 8
      %2272 = vperm.xlu0 %2271, %v1523
      %v2273 = vpop.permute.xlu0 %2272
      %2275 = vset.pattern.permute.xlu0 8
      %2276 = vperm.xlu0 %2275, %v1524
      %v2277 = vpop.permute.xlu0 %2276
      %2279 = vset.pattern.permute.xlu0 8
      %2280 = vperm.xlu0 %2279, %v1525
      %v2281 = vpop.permute.xlu0 %2280
      %2283 = vset.pattern.permute.xlu0 8
      %2284 = vperm.xlu0 %2283, %v1526
      %v2285 = vpop.permute.xlu0 %2284
      %v2287 = vmul.f32 %v2263, %v2273
      %v2288 = vmul.f32 %v2264, %v2273
      %v2289 = vmul.f32 %v1221, %v2273
      %v2290 = vmul.f32 %v2265, %v2277
      %v2291 = vmul.f32 %v2266, %v2277
      %v2292 = vmul.f32 %v1221, %v2277
      %v2293 = vmul.f32 %v2267, %v2281
      %v2294 = vmul.f32 %v2268, %v2281
      %v2295 = vmul.f32 %v1221, %v2281
      %v2296 = vmul.f32 %v2269, %v2285
      %v2297 = vmul.f32 %v2270, %v2285
      %v2298 = vmul.f32 %v1221, %v2285
      %2311 = vrot.lane.b32.xlu0 %v2287, 94
      %v2312 = vpop.permute.xlu0 %2311
      %2313 = vrot.lane.b32.xlu0 %v2288, 94
      %v2314 = vpop.permute.xlu0 %2313
      %2315 = vrot.lane.b32.xlu0 %v2289, 94
      %v2316 = vpop.permute.xlu0 %2315
      %2317 = vrot.lane.b32.xlu0 %v2290, 94
      %v2318 = vpop.permute.xlu0 %2317
      %2319 = vrot.lane.b32.xlu0 %v2291, 94
      %v2320 = vpop.permute.xlu0 %2319
      %2321 = vrot.lane.b32.xlu0 %v2292, 94
      %v2322 = vpop.permute.xlu0 %2321
      %2323 = vrot.lane.b32.xlu0 %v2293, 94
      %v2324 = vpop.permute.xlu0 %2323
      %2325 = vrot.lane.b32.xlu0 %v2294, 94
      %v2326 = vpop.permute.xlu0 %2325
      %2327 = vrot.lane.b32.xlu0 %v2295, 94
      %v2328 = vpop.permute.xlu0 %2327
      %2329 = vrot.lane.b32.xlu0 %v2296, 94
      %v2330 = vpop.permute.xlu0 %2329
      %2331 = vrot.lane.b32.xlu0 %v2297, 94
      %v2332 = vpop.permute.xlu0 %2331
      %2333 = vrot.lane.b32.xlu0 %v2298, 94
      %v2334 = vpop.permute.xlu0 %2333
      %v2335 = vsel %vm1292, %v2312, %v2314
      %v2336 = vsel %vm1292, %v2314, %v2316
      %v2337 = vsel %vm1292, %v2318, %v2320
      %v2338 = vsel %vm1292, %v2320, %v2322
      %v2339 = vsel %vm1292, %v2324, %v2326
      %v2340 = vsel %vm1292, %v2326, %v2328
      %v2341 = vsel %vm1292, %v2330, %v2332
      %v2342 = vsel %vm1292, %v2332, %v2334
      %v2355 = vadd.f32 %v2251, %v2312
      %v2356 = vadd.f32 %v2252, %v2335
      %v2357 = vadd.f32 %v2253, %v2336
      %v2358 = vadd.f32 %v2254, %v2318
      %v2359 = vadd.f32 %v2255, %v2337
      %v2360 = vadd.f32 %v2256, %v2338
      %v2361 = vadd.f32 %v2257, %v2324
      %v2362 = vadd.f32 %v2258, %v2339
      %v2363 = vadd.f32 %v2259, %v2340
      %v2364 = vadd.f32 %v2260, %v2330
      %v2365 = vadd.f32 %v2261, %v2341
      %v2366 = vadd.f32 %v2262, %v2342
      %v2367 = vld [vmem:[%s7] sm:$0xff]
      %v2368 = vld [vmem:[%s7 + $0x8] sm:$0xff]
      %v2369 = vld [vmem:[%s7 + $0x10] sm:$0xff]
      %v2370 = vld [vmem:[%s7 + $0x18] sm:$0xff]
      %v2371 = vld [vmem:[%s8] sm:$0xff]
      %v2372 = vld [vmem:[%s8 + $0x8] sm:$0xff]
      %v2373 = vld [vmem:[%s8 + $0x10] sm:$0xff]
      %v2374 = vld [vmem:[%s8 + $0x18] sm:$0xff]
      %2376 = vset.pattern.permute.xlu0 0
      %2377 = vperm.xlu0 %2376, %v2371
      %v2378 = vpop.permute.xlu0 %2377
      %2381 = vset.pattern.permute.xlu0 0
      %2382 = vperm.xlu0 %2381, %v2372
      %v2383 = vpop.permute.xlu0 %2382
      %2386 = vset.pattern.permute.xlu0 0
      %2387 = vperm.xlu0 %2386, %v2373
      %v2388 = vpop.permute.xlu0 %2387
      %2391 = vset.pattern.permute.xlu0 0
      %2392 = vperm.xlu0 %2391, %v2374
      %v2393 = vpop.permute.xlu0 %2392
      %2407 = vrot.lane.b32.xlu0 %v2355, 17
      %v2408 = vpop.permute.xlu0 %2407
      %2409 = vrot.lane.b32.xlu0 %v2356, 17
      %v2410 = vpop.permute.xlu0 %2409
      %2411 = vrot.lane.b32.xlu0 %v2357, 17
      %v2412 = vpop.permute.xlu0 %2411
      %2413 = vrot.lane.b32.xlu0 %v2358, 17
      %v2414 = vpop.permute.xlu0 %2413
      %2415 = vrot.lane.b32.xlu0 %v2359, 17
      %v2416 = vpop.permute.xlu0 %2415
      %2417 = vrot.lane.b32.xlu0 %v2360, 17
      %v2418 = vpop.permute.xlu0 %2417
      %2419 = vrot.lane.b32.xlu0 %v2361, 17
      %v2420 = vpop.permute.xlu0 %2419
      %2421 = vrot.lane.b32.xlu0 %v2362, 17
      %v2422 = vpop.permute.xlu0 %2421
      %2423 = vrot.lane.b32.xlu0 %v2363, 17
      %v2424 = vpop.permute.xlu0 %2423
      %2425 = vrot.lane.b32.xlu0 %v2364, 17
      %v2426 = vpop.permute.xlu0 %2425
      %2427 = vrot.lane.b32.xlu0 %v2365, 17
      %v2428 = vpop.permute.xlu0 %2427
      %2429 = vrot.lane.b32.xlu0 %v2366, 17
      %v2430 = vpop.permute.xlu0 %2429
      %v2431 = vsel %vm1214, %v2408, %v2410
      %v2432 = vsel %vm1214, %v2410, %v2412
      %v2433 = vsel %vm1214, %v2414, %v2416
      %v2434 = vsel %vm1214, %v2416, %v2418
      %v2435 = vsel %vm1214, %v2420, %v2422
      %v2436 = vsel %vm1214, %v2422, %v2424
      %v2437 = vsel %vm1214, %v2426, %v2428
      %v2438 = vsel %vm1214, %v2428, %v2430
      %v2448 = vsel %vm1405, %v2367, 0
      %v2451 = vsel %vm1405, %v2368, 0
      %v2454 = vsel %vm1405, %v2369, 0
      %v2457 = vsel %vm1405, %v2370, 0
      %2459 = vmatprep.subr.mxu0 %v2432
      %2460 = vmatpush1.msra.mxu0 %v2431
      %2461 = vmatprep.subr.mxu0 %v2434
      %2462 = vmatpush1.msra.mxu0 %v2433
      %2463 = vmatprep.subr.mxu0 %v2436
      %2464 = vmatpush1.msra.mxu0 %v2435
      %2465 = vmatprep.subr.mxu0 %v2438
      %2466 = vmatpush1.msra.mxu0 %v2437
      %2467 = vmatprep.subr.mxu0 0.0
      %2468 = vmatpush1.msra.mxu0 0.0
      %2469 = vmatprep.subr.mxu0 0.0
      %2470 = vmatpush1.msra.mxu0 0.0
      %2471 = vmatprep.subr.mxu0 0.0
      %2472 = vmatpush1.msra.mxu0 0.0
      %2473 = vmatprep.subr.mxu0 0.0
      %2474 = vmatpush1.msra.mxu0 0.0
      %2475 = vmatprep.subr.mxu0 0.0
      %2476 = vmatpush1.msra.mxu0 0.0
      %2477 = vmatprep.subr.mxu0 0.0
      %2478 = vmatpush1.msra.mxu0 0.0
      %2479 = vmatprep.subr.mxu0 0.0
      %2480 = vmatpush1.msra.mxu0 0.0
      %2481 = vmatprep.subr.mxu0 0.0
      %2482 = vmatpush1.msra.mxu0 0.0
      %2483 = vmatprep.subr.mxu0 0.0
      %2484 = vmatpush1.msra.mxu0 0.0
      %2485 = vmatprep.subr.mxu0 0.0
      %2486 = vmatpush1.msra.mxu0 0.0
      %2487 = vmatprep.subr.mxu0 0.0
      %2488 = vmatpush1.msra.mxu0 0.0
      %2489 = vmatprep.subr.mxu0 0.0
      %2490 = vmatpush1.msra.mxu0 0.0
      %2491 = vmatprep.subr.mxu0 0.0
      %2492 = vmatpush1.msra.mxu0 0.0
      %2493 = vmatprep.subr.mxu0 0.0
      %2494 = vmatpush1.msra.mxu0 0.0
      %2495 = vmatprep.subr.mxu0 0.0
      %2496 = vmatpush1.msra.mxu0 0.0
      %2497 = vmatprep.subr.mxu0 0.0
      %2498 = vmatpush1.msra.mxu0 0.0
      %2499 = vmatprep.subr.mxu0 0.0
      %2500 = vmatpush1.msra.mxu0 0.0
      %2501 = vmatprep.subr.mxu0 0.0
      %2502 = vmatpush1.msra.mxu0 0.0
      %2503 = vmatprep.subr.mxu0 0.0
      %2504 = vmatpush1.msra.mxu0 0.0
      %2505 = vmatprep.subr.mxu0 0.0
      %2506 = vmatpush1.msra.mxu0 0.0
      %2507 = vmatprep.subr.mxu0 0.0
      %2508 = vmatpush1.msra.mxu0 0.0
      %2509 = vmatprep.subr.mxu0 0.0
      %2510 = vmatpush1.msra.mxu0 0.0
      %2511 = vmatprep.subr.mxu0 0.0
      %2512 = vmatpush1.msra.mxu0 0.0
      %2513 = vmatprep.subr.mxu0 0.0
      %2514 = vmatpush1.msra.mxu0 0.0
      %2515 = vmatprep.subr.mxu0 0.0
      %2516 = vmatpush1.msra.mxu0 0.0
      %2517 = vmatprep.subr.mxu0 0.0
      %2518 = vmatpush1.msra.mxu0 0.0
      %2519 = vmatprep.subr.mxu0 0.0
      %2520 = vmatpush1.msra.mxu0 0.0
      %2521 = vmatprep.subr.mxu0 0.0
      %2522 = vmatpush1.msra.mxu0 0.0
      %2523 = vmatprep.mubr.f32.mxu0 0.0
      %2524 = vmatmul.mubr.f32.gmra.mrb[0].mxu0 %v2448
      %v2525 = vpop.f32.mrb[0].mxu0
      %v2526 = vadd.f32 %v2378, %v2525
      %v2527 = vpop.f32.mrb[0].mxu0
      %v2528 = vadd.f32 %v2378, %v2527
      %2529 = vmatprep.mubr.f32.mxu0 0.0
      %2530 = vmatmul.mubr.f32.gmra.mrb[0].mxu0 %v2451
      %v2531 = vpop.f32.mrb[0].mxu0
      %v2532 = vadd.f32 %v2383, %v2531
      %v2533 = vpop.f32.mrb[0].mxu0
      %v2534 = vadd.f32 %v2383, %v2533
      %2535 = vmatprep.mubr.f32.mxu0 0.0
      %2536 = vmatmul.mubr.f32.gmra.mrb[0].mxu0 %v2454
      %v2537 = vpop.f32.mrb[0].mxu0
      %v2538 = vadd.f32 %v2388, %v2537
      %v2539 = vpop.f32.mrb[0].mxu0
      %v2540 = vadd.f32 %v2388, %v2539
      %2541 = vmatprep.mubr.f32.mxu0 0.0
      %2542 = vmatmul.mubr.f32.gmra.mrb[0].mxu0 %v2457
      %v2543 = vpop.f32.mrb[0].mxu0
      %v2544 = vadd.f32 %v2393, %v2543
      %v2545 = vpop.f32.mrb[0].mxu0
      %v2546 = vadd.f32 %v2393, %v2545
      %2547 = vdwg.mxu0
      %v2548 = vmul.f32 %v2526, 0.2
      %v2549 = vmul.f32 %v2528, 0.2
      %v2550 = vmul.f32 %v2532, 0.2
      %v2551 = vmul.f32 %v2534, 0.2
      %v2552 = vmul.f32 %v2538, 0.2
      %v2553 = vmul.f32 %v2540, 0.2
      %v2554 = vmul.f32 %v2544, 0.2
      %v2555 = vmul.f32 %v2546, 0.2
      %v2556 = vmax.f32 %v2526, %v2548
      %v2557 = vmax.f32 %v2528, %v2549
      %v2558 = vmax.f32 %v2532, %v2550
      %v2559 = vmax.f32 %v2534, %v2551
      %v2560 = vmax.f32 %v2538, %v2552
      %v2561 = vmax.f32 %v2540, %v2553
      %v2562 = vmax.f32 %v2544, %v2554
      %v2563 = vmax.f32 %v2546, %v2555
      %v2564 = vld [vmem:[%s9] sm:$0xff]
      %v2565 = vld [vmem:[%s9 + $0x8] sm:$0xff]
      %v2566 = vld [vmem:[%s9 + $0x10] sm:$0xff]
      %v2567 = vld [vmem:[%s9 + $0x18] sm:$0xff]
      %v2568 = vld [vmem:[%s10] sm:$0xff]
      %v2569 = vld [vmem:[%s10 + $0x8] sm:$0xff]
      %v2570 = vld [vmem:[%s10 + $0x10] sm:$0xff]
      %v2571 = vld [vmem:[%s10 + $0x18] sm:$0xff]
      %2573 = vset.pattern.permute.xlu0 0
      %2574 = vperm.xlu0 %2573, %v2568
      %v2575 = vpop.permute.xlu0 %2574
      %2578 = vset.pattern.permute.xlu0 0
      %2579 = vperm.xlu0 %2578, %v2569
      %v2580 = vpop.permute.xlu0 %2579
      %2583 = vset.pattern.permute.xlu0 0
      %2584 = vperm.xlu0 %2583, %v2570
      %v2585 = vpop.permute.xlu0 %2584
      %2588 = vset.pattern.permute.xlu0 0
      %2589 = vperm.xlu0 %2588, %v2571
      %v2590 = vpop.permute.xlu0 %2589
      %v2593 = vsel %vm1405, %v2564, 0
      %v2596 = vsel %vm1405, %v2565, 0
      %v2599 = vsel %vm1405, %v2566, 0
      %v2602 = vsel %vm1405, %v2567, 0
      %2604 = vmatprep.subr.mxu0 %v388
      %2605 = vmatpush1.msra.mxu0 %v387
      %2606 = vmatprep.subr.mxu0 %v390
      %2607 = vmatpush1.msra.mxu0 %v389
      %2608 = vmatprep.subr.mxu0 %v392
      %2609 = vmatpush1.msra.mxu0 %v391
      %2610 = vmatprep.subr.mxu0 %v394
      %2611 = vmatpush1.msra.mxu0 %v393
      %2612 = vmatprep.subr.mxu0 0.0
      %2613 = vmatpush1.msra.mxu0 0.0
      %2614 = vmatprep.subr.mxu0 0.0
      %2615 = vmatpush1.msra.mxu0 0.0
      %2616 = vmatprep.subr.mxu0 0.0
      %2617 = vmatpush1.msra.mxu0 0.0
      %2618 = vmatprep.subr.mxu0 0.0
      %2619 = vmatpush1.msra.mxu0 0.0
      %2620 = vmatprep.subr.mxu0 0.0
      %2621 = vmatpush1.msra.mxu0 0.0
      %2622 = vmatprep.subr.mxu0 0.0
      %2623 = vmatpush1.msra.mxu0 0.0
      %2624 = vmatprep.subr.mxu0 0.0
      %2625 = vmatpush1.msra.mxu0 0.0
      %2626 = vmatprep.subr.mxu0 0.0
      %2627 = vmatpush1.msra.mxu0 0.0
      %2628 = vmatprep.subr.mxu0 0.0
      %2629 = vmatpush1.msra.mxu0 0.0
      %2630 = vmatprep.subr.mxu0 0.0
      %2631 = vmatpush1.msra.mxu0 0.0
      %2632 = vmatprep.subr.mxu0 0.0
      %2633 = vmatpush1.msra.mxu0 0.0
      %2634 = vmatprep.subr.mxu0 0.0
      %2635 = vmatpush1.msra.mxu0 0.0
      %2636 = vmatprep.subr.mxu0 0.0
      %2637 = vmatpush1.msra.mxu0 0.0
      %2638 = vmatprep.subr.mxu0 0.0
      %2639 = vmatpush1.msra.mxu0 0.0
      %2640 = vmatprep.subr.mxu0 0.0
      %2641 = vmatpush1.msra.mxu0 0.0
      %2642 = vmatprep.subr.mxu0 0.0
      %2643 = vmatpush1.msra.mxu0 0.0
      %2644 = vmatprep.subr.mxu0 0.0
      %2645 = vmatpush1.msra.mxu0 0.0
      %2646 = vmatprep.subr.mxu0 0.0
      %2647 = vmatpush1.msra.mxu0 0.0
      %2648 = vmatprep.subr.mxu0 0.0
      %2649 = vmatpush1.msra.mxu0 0.0
      %2650 = vmatprep.subr.mxu0 0.0
      %2651 = vmatpush1.msra.mxu0 0.0
      %2652 = vmatprep.subr.mxu0 0.0
      %2653 = vmatpush1.msra.mxu0 0.0
      %2654 = vmatprep.subr.mxu0 0.0
      %2655 = vmatpush1.msra.mxu0 0.0
      %2656 = vmatprep.subr.mxu0 0.0
      %2657 = vmatpush1.msra.mxu0 0.0
      %2658 = vmatprep.subr.mxu0 0.0
      %2659 = vmatpush1.msra.mxu0 0.0
      %2660 = vmatprep.subr.mxu0 0.0
      %2661 = vmatpush1.msra.mxu0 0.0
      %2662 = vmatprep.subr.mxu0 0.0
      %2663 = vmatpush1.msra.mxu0 0.0
      %2664 = vmatprep.subr.mxu0 0.0
      %2665 = vmatpush1.msra.mxu0 0.0
      %2666 = vmatprep.subr.mxu0 0.0
      %2667 = vmatpush1.msra.mxu0 0.0
      %2668 = vmatprep.mubr.f32.mxu0 0.0
      %2669 = vmatmul.mubr.f32.gmra.mrb[0].mxu0 %v2593
      %v2670 = vpop.f32.mrb[0].mxu0
      %v2671 = vadd.f32 %v2575, %v2670
      %v2672 = vpop.f32.mrb[0].mxu0
      %v2673 = vadd.f32 %v2575, %v2672
      %2674 = vmatprep.mubr.f32.mxu0 0.0
      %2675 = vmatmul.mubr.f32.gmra.mrb[0].mxu0 %v2596
      %v2676 = vpop.f32.mrb[0].mxu0
      %v2677 = vadd.f32 %v2580, %v2676
      %v2678 = vpop.f32.mrb[0].mxu0
      %v2679 = vadd.f32 %v2580, %v2678
      %2680 = vmatprep.mubr.f32.mxu0 0.0
      %2681 = vmatmul.mubr.f32.gmra.mrb[0].mxu0 %v2599
      %v2682 = vpop.f32.mrb[0].mxu0
      %v2683 = vadd.f32 %v2585, %v2682
      %v2684 = vpop.f32.mrb[0].mxu0
      %v2685 = vadd.f32 %v2585, %v2684
      %2686 = vmatprep.mubr.f32.mxu0 0.0
      %2687 = vmatmul.mubr.f32.gmra.mrb[0].mxu0 %v2602
      %v2688 = vpop.f32.mrb[0].mxu0
      %v2689 = vadd.f32 %v2590, %v2688
      %v2690 = vpop.f32.mrb[0].mxu0
      %v2691 = vadd.f32 %v2590, %v2690
      %2692 = vdwg.mxu0
      %v2693 = vadd.f32 %v2556, %v2671
      %v2694 = vadd.f32 %v2557, %v2673
      %v2695 = vadd.f32 %v2558, %v2677
      %v2696 = vadd.f32 %v2559, %v2679
      %v2697 = vadd.f32 %v2560, %v2683
      %v2698 = vadd.f32 %v2561, %v2685
      %v2699 = vadd.f32 %v2562, %v2689
      %v2700 = vadd.f32 %v2563, %v2691
      %2701 = vst [vmem:[%s386] sm:$0xff] %v2693
      %2702 = vst [vmem:[%s386 + $0x8] sm:$0xff] %v2694
      %2703 = vst [vmem:[%s386 + $0x10] sm:$0xff] %v2695
      %2704 = vst [vmem:[%s386 + $0x18] sm:$0xff] %v2696
      %2705 = vst [vmem:[%s386 + $0x20] sm:$0xff] %v2697
      %2706 = vst [vmem:[%s386 + $0x28] sm:$0xff] %v2698
      %2707 = vst [vmem:[%s386 + $0x30] sm:$0xff] %v2699
      %2708 = vst [vmem:[%s386 + $0x38] sm:$0xff] %v2700
      %p2709 = scmp.lt.s32.totalorder %s22, 1
      %s2710 = scalar_select %p2709, %s22, 1
      %s2711 = smul.addr %s2710, 8
      %s2712 = smul.addr %s2711, 8
      %s2713 = scalar_lea.vmem %s11, %s2712
      // Predicated region
      $region65: #{res_dwconv2_block.1} parent=63 // pred_check
        %p2714 = pneg %p276
      $region66: #{res_dwconv2_block.1} parent=63 // pred_check_branch
        %2716 = sbr.rel (%p2714) target = $region68
      $region67: #{res_dwconv2_block.1} parent=63 // pred_region
        _
      $region68: #{res_dwconv2_block.1} parent=63 // pred_fallthru
        _
    $region64: #{res_dwconv2_block.1} parent=5 // pred_fallthru
      _
    %p2717 = scmp.le.s32.totalorder 2, %s17
    // Predicated region
    $region69: #{res_dwconv2_block.1} parent=5 // pred_check
      %p2718 = pneg %p2717
    $region70: #{res_dwconv2_block.1} parent=5 // pred_check_branch
      %2720 = sbr.rel (%p2718) target = $region72
    $region71: #{res_dwconv2_block.1} parent=5 // pred_region
      %s2721 = ssub.s32 %s17, 2
      // Predicated region
      $region73: #{res_dwconv2_block.1} parent=71 // pred_check
        %p2722 = pneg %p282
      $region74: #{res_dwconv2_block.1} parent=71 // pred_check_branch
        %2724 = sbr.rel (%p2722) target = $region76
      $region75: #{res_dwconv2_block.1} parent=71 // pred_region
        %p2725 = scmp.lt.s32.totalorder %s23, 1
        %s2726 = scalar_select %p2725, %s23, 1
        %s2727 = smul.addr %s2726, 8
        %s2728 = smul.addr %s2727, 8
        %s2729 = scalar_lea.vmem %s11, %s2728
      $region76: #{res_dwconv2_block.1} parent=71 // pred_fallthru
        _
    $region72: #{res_dwconv2_block.1} parent=5 // pred_fallthru
      _
  $region6: #{res_dwconv2_block.1} parent=0 // loop_footer
    %s21 = sadd.s32 1, %s17
  $region7: #{res_dwconv2_block.1} parent=0 // loop_footer_branch
    %16 = sbr.rel target = $region3
  $region8: #{res_dwconv2_block.1} parent=0 // loop_exit
    _

</llo_original>
